<compile_context>
chip_gen: v7x
topology: tpu7x:2x2x1
jax: 0.10.0
libtpu: 0.0.40
codegen_flags: <defaults>
</compile_context>

<pallas_src>
import math

import jax
import jax.numpy as jnp
import numpy as np
from jax.experimental import pallas as pl
from jax.experimental.pallas import tpu as pltpu

# ----------------------------- model config ---------------------------------
B = 2            # batch
S = 64           # sequence length (<= 1025)
DIM = 64         # model dim
HEAD_DIM = 32
N_HEADS = DIM // HEAD_DIM
D_ROT = HEAD_DIM // 4      # rotary dim per half (theta last-dim size)
LN_EPS = 1e-5
NEG_BIG = -1e30            # finite large-negative causal bias (robust vs -inf rows)


# ----------------------------- fused Pallas kernel ----------------------------
def fused_attn_kernel(x_ref, g_ref, bln_ref, w5_ref, b5_ref,
                      cos_ref, sin_ref, wout_ref, bout_ref, o_ref):
    """b_blk batch elements: LayerNorm -> widened proj -> RoPE -> causal SDPA -> out proj."""
    b_blk, s, d = x_ref.shape
    n_heads = d // HEAD_DIM
    rows = b_blk * s

    # ---- LayerNorm over the channel dim on the flattened (rows, D) slab ----
    x = x_ref[...].reshape(rows, d).astype(jnp.float32)
    mean = jnp.mean(x, axis=-1, keepdims=True)
    var = jnp.mean(jnp.square(x - mean), axis=-1, keepdims=True)
    xn = (x - mean) * jax.lax.rsqrt(var + LN_EPS)
    xn = xn * g_ref[...] + bln_ref[...]

    # ---- ONE widened projection: [ q | k | q@Psw | k@Psw | v ]  (rows, 5D) ----
    proj = jnp.dot(xn, w5_ref[...], preferred_element_type=jnp.float32) + b5_ref[...]
    qk = proj[:, 0:2 * d]          # (rows, 128) lane-dense [q | k]
    qksw = proj[:, 2 * d:4 * d]    # (rows, 128) pre-swapped rotary halves
    v = proj[:, 4 * d:5 * d]       # (rows, 64)

    # ---- RoPE on the full-lane slab; 1/sqrt(head_dim) folded into the q half ----
    qk_rot = qk * cos_ref[...] + qksw * sin_ref[...]

    # ---- causal additive bias generated in-kernel (no O(S^2) HBM table) ----
    ri = jax.lax.broadcasted_iota(jnp.int32, (s, s), 0)
    ci = jax.lax.broadcasted_iota(jnp.int32, (s, s), 1)
    bias = jnp.where(ri >= ci, 0.0, NEG_BIG).astype(jnp.float32)

    # ---- per-(batch, head) causal attention; stage outputs into one (rows, D) slab ----
    outs = []
    for bb in range(b_blk):                                   # static unroll (<= B)
        r0 = bb * s
        heads = []
        for h in range(n_heads):                              # static unroll (N_HEADS = 2)
            lo = h * HEAD_DIM
            qh = qk_rot[r0:r0 + s, lo:lo + HEAD_DIM]          # (S, Dh), already scaled
            kh = qk_rot[r0:r0 + s, d + lo:d + lo + HEAD_DIM]  # (S, Dh)
            vh = v[r0:r0 + s, lo:lo + HEAD_DIM]               # (S, Dh)
            sc = jax.lax.dot_general(qh, kh, (((1,), (1,)), ((), ())),
                                     preferred_element_type=jnp.float32)   # (S, S)
            sc = sc + bias
            m = jnp.max(sc, axis=-1, keepdims=True)
            p = jnp.exp(sc - m)
            l = jnp.sum(p, axis=-1, keepdims=True)
            oh = jnp.dot(p, vh, preferred_element_type=jnp.float32)        # (S, Dh)
            heads.append(oh * pl.reciprocal(l, approx=False))
        outs.append(jnp.concatenate(heads, axis=-1))          # (S, D)
    o_all = jnp.concatenate(outs, axis=0)                     # (rows, D)

    # ---- ONE K=64 output projection over all batches & heads ----
    out = jnp.dot(o_all, wout_ref[...], preferred_element_type=jnp.float32) + bout_ref[...]
    o_ref[...] = out.reshape(b_blk, s, d).astype(o_ref.dtype)


# ----------------------------- Pallas wrapper ----------------------------------
def _tensorcores_per_chip() -> int:
    """1 on v5e/v6e, 2 on v7x. Fallback to 1 (batch-collapse) if unknown."""
    try:
        kind = jax.devices()[0].device_kind.lower()
    except Exception:
        return 1
    return 2 if ("v7" in kind or "tpu7" in kind) else 1


def self_attention_forward(x, params, theta):
    b, s, d = x.shape
    h, dh, dr = N_HEADS, HEAD_DIM, D_ROT

    # v5e/v6e (1 TC): collapse the batch into one grid step (M = B*S fills sublanes).
    # v7x (2 TCs): one batch element per grid step, sharded across cores.
    b_blk = 1 if (_tensorcores_per_chip() > 1 and b > 1) else b
    assert b % b_blk == 0
    nb = b // b_blk
    rows = b_blk * s

    # --- batch-invariant precompute: RoPE tables (scale folded into q half) ---
    scale = 1.0 / math.sqrt(dh)
    th = theta[:s].astype(jnp.float32)                         # (S, H, dr)
    cos = jnp.cos(th)
    sin = jnp.sin(th)
    pad1 = jnp.ones((s, h, dh - 2 * dr), jnp.float32)
    pad0 = jnp.zeros((s, h, dh - 2 * dr), jnp.float32)
    cos_full = jnp.concatenate([cos, cos, pad1], axis=-1).reshape(s, d)    # (S, D)
    sin_full = jnp.concatenate([-sin, sin, pad0], axis=-1).reshape(s, d)   # (S, D)
    cos_qk = jnp.concatenate([cos_full * scale, cos_full], axis=-1)        # (S, 2D) [q | k]
    sin_qk = jnp.concatenate([sin_full * scale, sin_full], axis=-1)
    cos_t = jnp.tile(cos_qk, (b_blk, 1))                                   # (rows, 2D)
    sin_t = jnp.tile(sin_qk, (b_blk, 1))

    # pairwise-swap permutation for the rotary halves (position independent),
    # folded into the projection weights so q_swap/k_swap come out of the one matmul.
    psw_np = np.zeros((d, d), np.float32)
    for hh in range(h):
        base = hh * dh
        for i in range(dr):
            psw_np[base + dr + i, base + i] = 1.0      # col (x1 slot) <- x2
            psw_np[base + i, base + dr + i] = 1.0      # col (x2 slot) <- x1
    psw = jnp.asarray(psw_np)

    wq = params["w_qkv"][:, 0:d]
    wk = params["w_qkv"][:, d:2 * d]
    wv = params["w_qkv"][:, 2 * d:3 * d]
    bq = params["b_qkv"][0:d]
    bk = params["b_qkv"][d:2 * d]
    bv = params["b_qkv"][2 * d:3 * d]
    w5 = jnp.concatenate([wq, wk, wq @ psw, wk @ psw, wv], axis=1)         # (D, 5D)
    b5 = jnp.concatenate([bq, bk, bq @ psw, bk @ psw, bv]).reshape(1, 5 * d)

    def full(shape):
        return pl.BlockSpec(shape, lambda bi: (0,) * len(shape))

    return pl.pallas_call(
        fused_attn_kernel,
        out_shape=jax.ShapeDtypeStruct((b, s, d), x.dtype),
        grid=(nb,),
        in_specs=[
            pl.BlockSpec((b_blk, s, d), lambda bi: (bi, 0, 0)),   # x
            full((1, d)), full((1, d)),                           # LN gamma / beta
            full((d, 5 * d)), full((1, 5 * d)),                   # widened proj weight / bias
            full((rows, 2 * d)), full((rows, 2 * d)),             # RoPE cos / sin [q | k]
            full((d, d)), full((1, d)),                           # out proj weight / bias
        ],
        out_specs=pl.BlockSpec((b_blk, s, d), lambda bi: (bi, 0, 0)),
        compiler_params=pltpu.CompilerParams(dimension_semantics=("parallel",)),
    )(x, params["ln_g"].reshape(1, d), params["ln_b"].reshape(1, d),
      w5, b5, cos_t, sin_t, params["w_out"], params["b_out"].reshape(1, d))


# ----------------------------- parameter / theta setup ------------------------
def make_axial_pos(hh, ww):
    h_pos = jnp.linspace(-1.0, 1.0, hh + 1)
    w_pos = jnp.linspace(-1.0, 1.0, ww + 1)
    h_pos = (h_pos[:-1] + h_pos[1:]) / 2
    w_pos = (w_pos[:-1] + w_pos[1:]) / 2
    gh, gw = jnp.meshgrid(h_pos, w_pos, indexing="ij")
    return jnp.stack([gh, gw], axis=-1).reshape(hh * ww, 2)


def make_theta():
    log_min = math.log(math.pi)
    log_max = math.log(10 * math.pi)
    nf = N_HEADS * HEAD_DIM // 8
    freqs = jnp.exp(jnp.linspace(log_min, log_max, nf + 1)[:-1])
    freqs = freqs.reshape(HEAD_DIM // 8, N_HEADS).T            # (H, head_dim//8)
    pos = make_axial_pos(32, 32)
    pos = jnp.concatenate([jnp.zeros((1, 2)), pos], axis=0)    # (1025, 2)
    theta_h = pos[:, None, 0:1] * freqs                        # (1025, H, head_dim//8)
    theta_w = pos[:, None, 1:2] * freqs
    return jnp.concatenate([theta_h, theta_w], axis=-1)        # (1025, H, head_dim//4)


def init_params(key):
    k1, k2, k3 = jax.random.split(key, 3)
    return {
        "ln_g": jnp.ones((DIM,), jnp.float32),
        "ln_b": jnp.zeros((DIM,), jnp.float32),
        "w_qkv": jax.random.normal(k1, (DIM, 3 * DIM), jnp.float32) / math.sqrt(DIM),
        "b_qkv": 0.01 * jax.random.normal(k2, (3 * DIM,), jnp.float32),
        # NOTE: the original module zero-inits out_proj; small random init used
        # here so the output is non-trivial and the full pipeline is exercised.
        "w_out": 0.02 * jax.random.normal(k3, (DIM, DIM), jnp.float32),
        "b_out": jnp.zeros((DIM,), jnp.float32),
    }


# ----------------------------- pure-JAX reference ------------------------------
def self_attention_reference(x, params, theta):
    b, s, d = x.shape
    h, dh, dr = N_HEADS, HEAD_DIM, D_ROT

    mean = x.mean(-1, keepdims=True)
    var = jnp.square(x - mean).mean(-1, keepdims=True)
    xn = (x - mean) / jnp.sqrt(var + LN_EPS) * params["ln_g"] + params["ln_b"]
    qkv = xn @ params["w_qkv"] + params["b_qkv"]
    qkv = qkv.reshape(b, s, 3, h, dh).transpose(0, 3, 2, 1, 4)
    q, k, v = qkv[:, :, 0], qkv[:, :, 1], qkv[:, :, 2]

    th = jnp.broadcast_to(theta[:s][None], (b, s, h, dr)).transpose(0, 2, 1, 3)
    cos, sin = jnp.cos(th), jnp.sin(th)

    def rot(x_):
        x1, x2, rest = x_[..., :dr], x_[..., dr:2 * dr], x_[..., 2 * dr:]
        return jnp.concatenate([x1 * cos - x2 * sin, x2 * cos + x1 * sin, rest], -1)

    q, k = rot(q), rot(k)
    scores = jnp.einsum("bhqd,bhkd->bhqk", q, k) / math.sqrt(dh)
    mask = jnp.tril(jnp.ones((s, s), bool))
    scores = jnp.where(mask, scores, -jnp.inf)
    p = jax.nn.softmax(scores, axis=-1)
    o = jnp.einsum("bhqk,bhkd->bhqd", p, v)
    o = o.transpose(0, 2, 1, 3).reshape(b, s, h * dh)
    return o @ params["w_out"] + params["b_out"]


# ----------------------------------- main --------------------------------------
if __name__ == "__main__":
    key = jax.random.PRNGKey(0)
    kx, kp = jax.random.split(key)
    x = jax.random.normal(kx, (B, S, DIM), jnp.float32)
    params = init_params(kp)
    theta = make_theta()

    out = jax.jit(self_attention_forward)(x, params, theta)
    out = jax.block_until_ready(out)

    ref = self_attention_reference(x, params, theta)
    np.testing.assert_allclose(np.asarray(out), np.asarray(ref), rtol=2e-3, atol=2e-3)

    print("KERNEL_OK")
</pallas_src>

<mosaic_0001>
module attributes {stable_mosaic.version = 11 : i64} {
  func.func @fused_attn_kernel(%arg0: i32, %arg1: memref<2x64x64xf32, #tpu.memory_space<vmem>>, %arg2: memref<1x64xf32, #tpu.memory_space<vmem>>, %arg3: memref<1x64xf32, #tpu.memory_space<vmem>>, %arg4: memref<64x320xf32, #tpu.memory_space<vmem>>, %arg5: memref<1x320xf32, #tpu.memory_space<vmem>>, %arg6: memref<128x128xf32, #tpu.memory_space<vmem>>, %arg7: memref<128x128xf32, #tpu.memory_space<vmem>>, %arg8: memref<64x64xf32, #tpu.memory_space<vmem>>, %arg9: memref<1x64xf32, #tpu.memory_space<vmem>>, %arg10: memref<2x64x64xf32, #tpu.memory_space<vmem>>) attributes {dimension_semantics = [#tpu.dimension_semantics<parallel>], iteration_bounds = array<i64: 1>, scalar_prefetch = 0 : i64, scratch_operands = 0 : i64, tpu.core_type = #tpu.core_type<tc>, window_params = [{transform_indices = @transform_0, window_bounds = array<i64: 2, 64, 64>}, {pipeline_mode = #tpu.pipeline_mode<synchronous>, transform_indices = @transform_1, window_bounds = array<i64: 1, 64>}, {pipeline_mode = #tpu.pipeline_mode<synchronous>, transform_indices = @transform_2, window_bounds = array<i64: 1, 64>}, {pipeline_mode = #tpu.pipeline_mode<synchronous>, transform_indices = @transform_3, window_bounds = array<i64: 64, 320>}, {pipeline_mode = #tpu.pipeline_mode<synchronous>, transform_indices = @transform_4, window_bounds = array<i64: 1, 320>}, {pipeline_mode = #tpu.pipeline_mode<synchronous>, transform_indices = @transform_5, window_bounds = array<i64: 128, 128>}, {pipeline_mode = #tpu.pipeline_mode<synchronous>, transform_indices = @transform_6, window_bounds = array<i64: 128, 128>}, {pipeline_mode = #tpu.pipeline_mode<synchronous>, transform_indices = @transform_7, window_bounds = array<i64: 64, 64>}, {pipeline_mode = #tpu.pipeline_mode<synchronous>, transform_indices = @transform_8, window_bounds = array<i64: 1, 64>}, {transform_indices = @transform_9, window_bounds = array<i64: 2, 64, 64>}]} {
    %c0 = arith.constant 0 : index
    %c0_0 = arith.constant 0 : index
    %c0_1 = arith.constant 0 : index
    %0 = vector.load %arg1[%c0, %c0_0, %c0_1] : memref<2x64x64xf32, #tpu.memory_space<vmem>>, vector<2x64x64xf32>
    %1 = vector.shape_cast %0 : vector<2x64x64xf32> to vector<128x64xf32>
    %cst = arith.constant dense<0.000000e+00> : vector<128xf32>
    %2 = vector.multi_reduction <add>, %1, %cst [1] : vector<128x64xf32> to vector<128xf32>
    %3 = vector.shape_cast %2 : vector<128xf32> to vector<128x1xf32>
    %cst_2 = arith.constant 6.400000e+01 : f32
    %4 = vector.broadcast %cst_2 : f32 to vector<128x1xf32>
    %5 = arith.divf %3, %4 : vector<128x1xf32>
    %6 = vector.broadcast %5 : vector<128x1xf32> to vector<128x64xf32>
    %7 = arith.subf %1, %6 : vector<128x64xf32>
    %8 = arith.mulf %7, %7 : vector<128x64xf32>
    %cst_3 = arith.constant dense<0.000000e+00> : vector<128xf32>
    %9 = vector.multi_reduction <add>, %8, %cst_3 [1] : vector<128x64xf32> to vector<128xf32>
    %10 = vector.shape_cast %9 : vector<128xf32> to vector<128x1xf32>
    %cst_4 = arith.constant 6.400000e+01 : f32
    %11 = vector.broadcast %cst_4 : f32 to vector<128x1xf32>
    %12 = arith.divf %10, %11 : vector<128x1xf32>
    %13 = vector.broadcast %5 : vector<128x1xf32> to vector<128x64xf32>
    %14 = arith.subf %1, %13 : vector<128x64xf32>
    %cst_5 = arith.constant 9.99999974E-6 : f32
    %15 = vector.broadcast %cst_5 : f32 to vector<128x1xf32>
    %16 = arith.addf %12, %15 : vector<128x1xf32>
    %17 = math.rsqrt %16 : vector<128x1xf32>
    %18 = vector.broadcast %17 : vector<128x1xf32> to vector<128x64xf32>
    %19 = arith.mulf %14, %18 : vector<128x64xf32>
    %c0_6 = arith.constant 0 : index
    %c0_7 = arith.constant 0 : index
    %20 = vector.load %arg2[%c0_6, %c0_7] : memref<1x64xf32, #tpu.memory_space<vmem>>, vector<1x64xf32>
    %21 = vector.broadcast %20 : vector<1x64xf32> to vector<128x64xf32>
    %22 = arith.mulf %19, %21 : vector<128x64xf32>
    %c0_8 = arith.constant 0 : index
    %c0_9 = arith.constant 0 : index
    %23 = vector.load %arg3[%c0_8, %c0_9] : memref<1x64xf32, #tpu.memory_space<vmem>>, vector<1x64xf32>
    %24 = vector.broadcast %23 : vector<1x64xf32> to vector<128x64xf32>
    %25 = arith.addf %22, %24 : vector<128x64xf32>
    %c0_10 = arith.constant 0 : index
    %c0_11 = arith.constant 0 : index
    %26 = vector.load %arg4[%c0_10, %c0_11] : memref<64x320xf32, #tpu.memory_space<vmem>>, vector<64x320xf32>
    %cst_12 = arith.constant dense<0.000000e+00> : vector<128x320xf32>
    %27 = tpu.matmul %25, %26, %cst_12 {dimension_numbers = #tpu.dot_dimension_numbers<[1], [0], [0], [1], [0, 0, 1, 1], [], []>} : vector<128x64xf32>, vector<64x320xf32>, vector<128x320xf32> -> vector<128x320xf32>
    %c0_13 = arith.constant 0 : index
    %c0_14 = arith.constant 0 : index
    %28 = vector.load %arg5[%c0_13, %c0_14] : memref<1x320xf32, #tpu.memory_space<vmem>>, vector<1x320xf32>
    %29 = vector.broadcast %28 : vector<1x320xf32> to vector<128x320xf32>
    %30 = arith.addf %27, %29 : vector<128x320xf32>
    %31 = vector.extract_strided_slice %30 {offsets = [0, 0], sizes = [128, 128], strides = [1, 1]} : vector<128x320xf32> to vector<128x128xf32>
    %32 = vector.extract_strided_slice %30 {offsets = [0, 128], sizes = [128, 128], strides = [1, 1]} : vector<128x320xf32> to vector<128x128xf32>
    %33 = vector.extract_strided_slice %30 {offsets = [0, 256], sizes = [128, 64], strides = [1, 1]} : vector<128x320xf32> to vector<128x64xf32>
    %c0_15 = arith.constant 0 : index
    %c0_16 = arith.constant 0 : index
    %34 = vector.load %arg6[%c0_15, %c0_16] : memref<128x128xf32, #tpu.memory_space<vmem>>, vector<128x128xf32>
    %35 = arith.mulf %31, %34 : vector<128x128xf32>
    %c0_17 = arith.constant 0 : index
    %c0_18 = arith.constant 0 : index
    %36 = vector.load %arg7[%c0_17, %c0_18] : memref<128x128xf32, #tpu.memory_space<vmem>>, vector<128x128xf32>
    %37 = arith.mulf %32, %36 : vector<128x128xf32>
    %38 = arith.addf %35, %37 : vector<128x128xf32>
    %39 = tpu.iota {dimensions = array<i32: 0>} : vector<64x64xi32>
    %40 = tpu.iota {dimensions = array<i32: 1>} : vector<64x64xi32>
    %41 = arith.cmpi sge, %39, %40 : vector<64x64xi32>
    %cst_19 = arith.constant 0.000000e+00 : f32
    %cst_20 = arith.constant -1.000000e+30 : f32
    %42 = vector.broadcast %cst_19 : f32 to vector<64x64xf32>
    %43 = vector.broadcast %cst_20 : f32 to vector<64x64xf32>
    %44 = arith.select %41, %42, %43 : vector<64x64xi1>, vector<64x64xf32>
    %45 = vector.extract_strided_slice %38 {offsets = [0, 0], sizes = [64, 32], strides = [1, 1]} : vector<128x128xf32> to vector<64x32xf32>
    %46 = vector.extract_strided_slice %38 {offsets = [0, 64], sizes = [64, 32], strides = [1, 1]} : vector<128x128xf32> to vector<64x32xf32>
    %47 = vector.extract_strided_slice %33 {offsets = [0, 0], sizes = [64, 32], strides = [1, 1]} : vector<128x64xf32> to vector<64x32xf32>
    %cst_21 = arith.constant dense<0.000000e+00> : vector<64x64xf32>
    %48 = tpu.matmul %45, %46, %cst_21 {dimension_numbers = #tpu.dot_dimension_numbers<[1], [1], [0], [0], [0, 0, 1, 0], [], []>} : vector<64x32xf32>, vector<64x32xf32>, vector<64x64xf32> -> vector<64x64xf32>
    %49 = arith.addf %48, %44 : vector<64x64xf32>
    %cst_22 = arith.constant dense<0xFF800000> : vector<64xf32>
    %50 = vector.multi_reduction <maximumf>, %49, %cst_22 [1] : vector<64x64xf32> to vector<64xf32>
    %51 = vector.shape_cast %50 : vector<64xf32> to vector<64x1xf32>
    %52 = vector.broadcast %51 : vector<64x1xf32> to vector<64x64xf32>
    %53 = arith.subf %49, %52 : vector<64x64xf32>
    %54 = math.exp %53 : vector<64x64xf32>
    %cst_23 = arith.constant dense<0.000000e+00> : vector<64xf32>
    %55 = vector.multi_reduction <add>, %54, %cst_23 [1] : vector<64x64xf32> to vector<64xf32>
    %56 = vector.shape_cast %55 : vector<64xf32> to vector<64x1xf32>
    %cst_24 = arith.constant dense<0.000000e+00> : vector<64x32xf32>
    %57 = tpu.matmul %54, %47, %cst_24 {dimension_numbers = #tpu.dot_dimension_numbers<[1], [0], [0], [1], [0, 0, 1, 1], [], []>} : vector<64x64xf32>, vector<64x32xf32>, vector<64x32xf32> -> vector<64x32xf32>
    %58 = tpu.reciprocal %56 : vector<64x1xf32> -> vector<64x1xf32>
    %59 = vector.broadcast %58 : vector<64x1xf32> to vector<64x32xf32>
    %60 = arith.mulf %57, %59 : vector<64x32xf32>
    %61 = vector.extract_strided_slice %38 {offsets = [0, 32], sizes = [64, 32], strides = [1, 1]} : vector<128x128xf32> to vector<64x32xf32>
    %62 = vector.extract_strided_slice %38 {offsets = [0, 96], sizes = [64, 32], strides = [1, 1]} : vector<128x128xf32> to vector<64x32xf32>
    %63 = vector.extract_strided_slice %33 {offsets = [0, 32], sizes = [64, 32], strides = [1, 1]} : vector<128x64xf32> to vector<64x32xf32>
    %cst_25 = arith.constant dense<0.000000e+00> : vector<64x64xf32>
    %64 = tpu.matmul %61, %62, %cst_25 {dimension_numbers = #tpu.dot_dimension_numbers<[1], [1], [0], [0], [0, 0, 1, 0], [], []>} : vector<64x32xf32>, vector<64x32xf32>, vector<64x64xf32> -> vector<64x64xf32>
    %65 = arith.addf %64, %44 : vector<64x64xf32>
    %cst_26 = arith.constant dense<0xFF800000> : vector<64xf32>
    %66 = vector.multi_reduction <maximumf>, %65, %cst_26 [1] : vector<64x64xf32> to vector<64xf32>
    %67 = vector.shape_cast %66 : vector<64xf32> to vector<64x1xf32>
    %68 = vector.broadcast %67 : vector<64x1xf32> to vector<64x64xf32>
    %69 = arith.subf %65, %68 : vector<64x64xf32>
    %70 = math.exp %69 : vector<64x64xf32>
    %cst_27 = arith.constant dense<0.000000e+00> : vector<64xf32>
    %71 = vector.multi_reduction <add>, %70, %cst_27 [1] : vector<64x64xf32> to vector<64xf32>
    %72 = vector.shape_cast %71 : vector<64xf32> to vector<64x1xf32>
    %cst_28 = arith.constant dense<0.000000e+00> : vector<64x32xf32>
    %73 = tpu.matmul %70, %63, %cst_28 {dimension_numbers = #tpu.dot_dimension_numbers<[1], [0], [0], [1], [0, 0, 1, 1], [], []>} : vector<64x64xf32>, vector<64x32xf32>, vector<64x32xf32> -> vector<64x32xf32>
    %74 = tpu.reciprocal %72 : vector<64x1xf32> -> vector<64x1xf32>
    %75 = vector.broadcast %74 : vector<64x1xf32> to vector<64x32xf32>
    %76 = arith.mulf %73, %75 : vector<64x32xf32>
    %77 = tpu.concatenate %60, %76 in 1 : vector<64x32xf32>, vector<64x32xf32> -> vector<64x64xf32>
    %78 = vector.extract_strided_slice %38 {offsets = [64, 0], sizes = [64, 32], strides = [1, 1]} : vector<128x128xf32> to vector<64x32xf32>
    %79 = vector.extract_strided_slice %38 {offsets = [64, 64], sizes = [64, 32], strides = [1, 1]} : vector<128x128xf32> to vector<64x32xf32>
    %80 = vector.extract_strided_slice %33 {offsets = [64, 0], sizes = [64, 32], strides = [1, 1]} : vector<128x64xf32> to vector<64x32xf32>
    %cst_29 = arith.constant dense<0.000000e+00> : vector<64x64xf32>
    %81 = tpu.matmul %78, %79, %cst_29 {dimension_numbers = #tpu.dot_dimension_numbers<[1], [1], [0], [0], [0, 0, 1, 0], [], []>} : vector<64x32xf32>, vector<64x32xf32>, vector<64x64xf32> -> vector<64x64xf32>
    %82 = arith.addf %81, %44 : vector<64x64xf32>
    %cst_30 = arith.constant dense<0xFF800000> : vector<64xf32>
    %83 = vector.multi_reduction <maximumf>, %82, %cst_30 [1] : vector<64x64xf32> to vector<64xf32>
    %84 = vector.shape_cast %83 : vector<64xf32> to vector<64x1xf32>
    %85 = vector.broadcast %84 : vector<64x1xf32> to vector<64x64xf32>
    %86 = arith.subf %82, %85 : vector<64x64xf32>
    %87 = math.exp %86 : vector<64x64xf32>
    %cst_31 = arith.constant dense<0.000000e+00> : vector<64xf32>
    %88 = vector.multi_reduction <add>, %87, %cst_31 [1] : vector<64x64xf32> to vector<64xf32>
    %89 = vector.shape_cast %88 : vector<64xf32> to vector<64x1xf32>
    %cst_32 = arith.constant dense<0.000000e+00> : vector<64x32xf32>
    %90 = tpu.matmul %87, %80, %cst_32 {dimension_numbers = #tpu.dot_dimension_numbers<[1], [0], [0], [1], [0, 0, 1, 1], [], []>} : vector<64x64xf32>, vector<64x32xf32>, vector<64x32xf32> -> vector<64x32xf32>
    %91 = tpu.reciprocal %89 : vector<64x1xf32> -> vector<64x1xf32>
    %92 = vector.broadcast %91 : vector<64x1xf32> to vector<64x32xf32>
    %93 = arith.mulf %90, %92 : vector<64x32xf32>
    %94 = vector.extract_strided_slice %38 {offsets = [64, 32], sizes = [64, 32], strides = [1, 1]} : vector<128x128xf32> to vector<64x32xf32>
    %95 = vector.extract_strided_slice %38 {offsets = [64, 96], sizes = [64, 32], strides = [1, 1]} : vector<128x128xf32> to vector<64x32xf32>
    %96 = vector.extract_strided_slice %33 {offsets = [64, 32], sizes = [64, 32], strides = [1, 1]} : vector<128x64xf32> to vector<64x32xf32>
    %cst_33 = arith.constant dense<0.000000e+00> : vector<64x64xf32>
    %97 = tpu.matmul %94, %95, %cst_33 {dimension_numbers = #tpu.dot_dimension_numbers<[1], [1], [0], [0], [0, 0, 1, 0], [], []>} : vector<64x32xf32>, vector<64x32xf32>, vector<64x64xf32> -> vector<64x64xf32>
    %98 = arith.addf %97, %44 : vector<64x64xf32>
    %cst_34 = arith.constant dense<0xFF800000> : vector<64xf32>
    %99 = vector.multi_reduction <maximumf>, %98, %cst_34 [1] : vector<64x64xf32> to vector<64xf32>
    %100 = vector.shape_cast %99 : vector<64xf32> to vector<64x1xf32>
    %101 = vector.broadcast %100 : vector<64x1xf32> to vector<64x64xf32>
    %102 = arith.subf %98, %101 : vector<64x64xf32>
    %103 = math.exp %102 : vector<64x64xf32>
    %cst_35 = arith.constant dense<0.000000e+00> : vector<64xf32>
    %104 = vector.multi_reduction <add>, %103, %cst_35 [1] : vector<64x64xf32> to vector<64xf32>
    %105 = vector.shape_cast %104 : vector<64xf32> to vector<64x1xf32>
    %cst_36 = arith.constant dense<0.000000e+00> : vector<64x32xf32>
    %106 = tpu.matmul %103, %96, %cst_36 {dimension_numbers = #tpu.dot_dimension_numbers<[1], [0], [0], [1], [0, 0, 1, 1], [], []>} : vector<64x64xf32>, vector<64x32xf32>, vector<64x32xf32> -> vector<64x32xf32>
    %107 = tpu.reciprocal %105 : vector<64x1xf32> -> vector<64x1xf32>
    %108 = vector.broadcast %107 : vector<64x1xf32> to vector<64x32xf32>
    %109 = arith.mulf %106, %108 : vector<64x32xf32>
    %110 = tpu.concatenate %93, %109 in 1 : vector<64x32xf32>, vector<64x32xf32> -> vector<64x64xf32>
    %111 = tpu.concatenate %77, %110 in 0 : vector<64x64xf32>, vector<64x64xf32> -> vector<128x64xf32>
    %c0_37 = arith.constant 0 : index
    %c0_38 = arith.constant 0 : index
    %112 = vector.load %arg8[%c0_37, %c0_38] : memref<64x64xf32, #tpu.memory_space<vmem>>, vector<64x64xf32>
    %cst_39 = arith.constant dense<0.000000e+00> : vector<128x64xf32>
    %113 = tpu.matmul %111, %112, %cst_39 {dimension_numbers = #tpu.dot_dimension_numbers<[1], [0], [0], [1], [0, 0, 1, 1], [], []>} : vector<128x64xf32>, vector<64x64xf32>, vector<128x64xf32> -> vector<128x64xf32>
    %c0_40 = arith.constant 0 : index
    %c0_41 = arith.constant 0 : index
    %114 = vector.load %arg9[%c0_40, %c0_41] : memref<1x64xf32, #tpu.memory_space<vmem>>, vector<1x64xf32>
    %115 = vector.broadcast %114 : vector<1x64xf32> to vector<128x64xf32>
    %116 = arith.addf %113, %115 : vector<128x64xf32>
    %117 = vector.shape_cast %116 : vector<128x64xf32> to vector<2x64x64xf32>
    %c0_42 = arith.constant 0 : index
    %c0_43 = arith.constant 0 : index
    %c0_44 = arith.constant 0 : index
    %118 = vector.load %arg10[%c0_42, %c0_43, %c0_44] : memref<2x64x64xf32, #tpu.memory_space<vmem>>, vector<2x64x64xf32>
    tpu.vector_store %arg10[%c0_42, %c0_43, %c0_44], %117 {strides = array<i32>} : memref<2x64x64xf32, #tpu.memory_space<vmem>>, vector<2x64x64xf32>,
    return
  }
  func.func @transform_0(%arg0: i32) -> (i32, i32, i32) {
    %c0_i32 = arith.constant 0 : i32
    %c0_i32_0 = arith.constant 0 : i32
    %c0_i32_1 = arith.constant 0 : i32
    return %arg0, %c0_i32, %c0_i32_0 : i32, i32, i32
  }
  func.func @transform_1(%arg0: i32) -> (i32, i32) {
    %c0_i32 = arith.constant 0 : i32
    %c0_i32_0 = arith.constant 0 : i32
    %c0_i32_1 = arith.constant 0 : i32
    return %c0_i32, %c0_i32_0 : i32, i32
  }
  func.func @transform_2(%arg0: i32) -> (i32, i32) {
    %c0_i32 = arith.constant 0 : i32
    %c0_i32_0 = arith.constant 0 : i32
    %c0_i32_1 = arith.constant 0 : i32
    return %c0_i32, %c0_i32_0 : i32, i32
  }
  func.func @transform_3(%arg0: i32) -> (i32, i32) {
    %c0_i32 = arith.constant 0 : i32
    %c0_i32_0 = arith.constant 0 : i32
    %c0_i32_1 = arith.constant 0 : i32
    return %c0_i32, %c0_i32_0 : i32, i32
  }
  func.func @transform_4(%arg0: i32) -> (i32, i32) {
    %c0_i32 = arith.constant 0 : i32
    %c0_i32_0 = arith.constant 0 : i32
    %c0_i32_1 = arith.constant 0 : i32
    return %c0_i32, %c0_i32_0 : i32, i32
  }
  func.func @transform_5(%arg0: i32) -> (i32, i32) {
    %c0_i32 = arith.constant 0 : i32
    %c0_i32_0 = arith.constant 0 : i32
    %c0_i32_1 = arith.constant 0 : i32
    return %c0_i32, %c0_i32_0 : i32, i32
  }
  func.func @transform_6(%arg0: i32) -> (i32, i32) {
    %c0_i32 = arith.constant 0 : i32
    %c0_i32_0 = arith.constant 0 : i32
    %c0_i32_1 = arith.constant 0 : i32
    return %c0_i32, %c0_i32_0 : i32, i32
  }
  func.func @transform_7(%arg0: i32) -> (i32, i32) {
    %c0_i32 = arith.constant 0 : i32
    %c0_i32_0 = arith.constant 0 : i32
    %c0_i32_1 = arith.constant 0 : i32
    return %c0_i32, %c0_i32_0 : i32, i32
  }
  func.func @transform_8(%arg0: i32) -> (i32, i32) {
    %c0_i32 = arith.constant 0 : i32
    %c0_i32_0 = arith.constant 0 : i32
    %c0_i32_1 = arith.constant 0 : i32
    return %c0_i32, %c0_i32_0 : i32, i32
  }
  func.func @transform_9(%arg0: i32) -> (i32, i32, i32) {
    %c0_i32 = arith.constant 0 : i32
    %c0_i32_0 = arith.constant 0 : i32
    %c0_i32_1 = arith.constant 0 : i32
    return %arg0, %c0_i32, %c0_i32_0 : i32, i32, i32
  }
}

</mosaic_0001>

<llo_original>
// kernel: self_attention_forward.1
$region0: #{self_attention_forward.1}
  #allocation0 [shape = 'u32[]', space=smem, size = 0x4, offset = 0x4, fixed_abs, tag = 'smem constant byte address 0x4 - core index']
  #allocation1 [shape = 'u32[144,128]{1,0:T(1,128)}', space=vmem, size = 0x12000, scoped, tag = 'internal scratch']
  %s0 = inlined_call_operand.vmem [shape: f32[2,64,64], index: 0, kind: input, shape index: {}]
  %s1 = inlined_call_operand.vmem [shape: f32[1,64], index: 1, kind: input, shape index: {}]
  %s2 = inlined_call_operand.vmem [shape: f32[1,64], index: 2, kind: input, shape index: {}]
  %s3 = inlined_call_operand.vmem [shape: f32[64,320], index: 3, kind: input, shape index: {}]
  %s4 = inlined_call_operand.vmem [shape: f32[1,320], index: 4, kind: input, shape index: {}]
  %s5 = inlined_call_operand.vmem [shape: f32[128,128], index: 5, kind: input, shape index: {}]
  %s6 = inlined_call_operand.vmem [shape: f32[128,128], index: 6, kind: input, shape index: {}]
  %s7 = inlined_call_operand.vmem [shape: f32[64,64], index: 7, kind: input, shape index: {}]
  %s8 = inlined_call_operand.vmem [shape: f32[1,64], index: 8, kind: input, shape index: {}]
  %s9 = inlined_call_operand.hbm [shape: f32[2,64,64], index: 9, kind: output, shape index: {}]
  %s10 = sld [smem:[#allocation0]]
  $region46: #{self_attention_forward.1} parent=0
    _
  %s12 = ssub.s32 1, %s10
  %s13 = scalar_select 0, %s12, %s10
  $region1: #{self_attention_forward.1} parent=0
    #allocation2 [shape = 'u8[65536]{0}', space=vmem, size = 0x10000, scoped, tag = 'output window, operand 0, single buffered']
    #allocation3 [shape = 's32[1]{0}', space=sflag, size = 0x4, scoped, tag = 'scoped memory for self_attention_forward.1']
    %14 = vsyncpa [#allocation3], 0
    // Predicated region
    $region2: #{self_attention_forward.1} parent=1 // pred_check
      _
    $region3: #{self_attention_forward.1} parent=1 // pred_check_branch
      %16 = sbr.rel (0) target = $region5
    $region4: #{self_attention_forward.1} parent=1 // pred_region
      _
    $region5: #{self_attention_forward.1} parent=1 // pred_fallthru
      _
    // Predicated region
    $region6: #{self_attention_forward.1} parent=1 // pred_check
      _
    $region7: #{self_attention_forward.1} parent=1 // pred_check_branch
      %18 = sbr.rel (0) target = $region9
    $region8: #{self_attention_forward.1} parent=1 // pred_region
      _
    $region9: #{self_attention_forward.1} parent=1 // pred_fallthru
      _
    // Predicated region
    $region10: #{self_attention_forward.1} parent=1 // pred_check
      _
    $region11: #{self_attention_forward.1} parent=1 // pred_check_branch
      %20 = sbr.rel (0) target = $region13
    $region12: #{self_attention_forward.1} parent=1 // pred_region
      _
    $region13: #{self_attention_forward.1} parent=1 // pred_fallthru
      _
    // Predicated region
    $region14: #{self_attention_forward.1} parent=1 // pred_check
      _
    $region15: #{self_attention_forward.1} parent=1 // pred_check_branch
      %22 = sbr.rel (0) target = $region17
    $region16: #{self_attention_forward.1} parent=1 // pred_region
      _
    $region17: #{self_attention_forward.1} parent=1 // pred_fallthru
      _
    // Predicated region
    $region18: #{self_attention_forward.1} parent=1 // pred_check
      _
    $region19: #{self_attention_forward.1} parent=1 // pred_check_branch
      %24 = sbr.rel (0) target = $region21
    $region20: #{self_attention_forward.1} parent=1 // pred_region
      _
    $region21: #{self_attention_forward.1} parent=1 // pred_fallthru
      _
    // Predicated region
    $region22: #{self_attention_forward.1} parent=1 // pred_check
      _
    $region23: #{self_attention_forward.1} parent=1 // pred_check_branch
      %26 = sbr.rel (0) target = $region25
    $region24: #{self_attention_forward.1} parent=1 // pred_region
      _
    $region25: #{self_attention_forward.1} parent=1 // pred_fallthru
      _
    // Predicated region
    $region26: #{self_attention_forward.1} parent=1 // pred_check
      _
    $region27: #{self_attention_forward.1} parent=1 // pred_check_branch
      %28 = sbr.rel (0) target = $region29
    $region28: #{self_attention_forward.1} parent=1 // pred_region
      _
    $region29: #{self_attention_forward.1} parent=1 // pred_fallthru
      _
    // Predicated region
    $region30: #{self_attention_forward.1} parent=1 // pred_check
      _
    $region31: #{self_attention_forward.1} parent=1 // pred_check_branch
      %30 = sbr.rel (0) target = $region33
    $region32: #{self_attention_forward.1} parent=1 // pred_region
      _
    $region33: #{self_attention_forward.1} parent=1 // pred_fallthru
      _
    // Predicated region
    $region34: #{self_attention_forward.1} parent=1 // pred_check
      _
    $region35: #{self_attention_forward.1} parent=1 // pred_check_branch
      %32 = sbr.rel (0) target = $region37
    $region36: #{self_attention_forward.1} parent=1 // pred_region
      _
    $region37: #{self_attention_forward.1} parent=1 // pred_fallthru
      _
    %v33 = vld [vmem:[%s0] sm:$0xff]
    %v34 = vld [vmem:[%s0 + $0x8] sm:$0xff]
    %v35 = vld [vmem:[%s0 + $0x10] sm:$0xff]
    %v36 = vld [vmem:[%s0 + $0x18] sm:$0xff]
    %v37 = vld [vmem:[%s0 + $0x20] sm:$0xff]
    %v38 = vld [vmem:[%s0 + $0x28] sm:$0xff]
    %v39 = vld [vmem:[%s0 + $0x30] sm:$0xff]
    %v40 = vld [vmem:[%s0 + $0x38] sm:$0xff]
    %v41 = vld [vmem:[%s0 + $0x40] sm:$0xff]
    %v42 = vld [vmem:[%s0 + $0x48] sm:$0xff]
    %v43 = vld [vmem:[%s0 + $0x50] sm:$0xff]
    %v44 = vld [vmem:[%s0 + $0x58] sm:$0xff]
    %v45 = vld [vmem:[%s0 + $0x60] sm:$0xff]
    %v46 = vld [vmem:[%s0 + $0x68] sm:$0xff]
    %v47 = vld [vmem:[%s0 + $0x70] sm:$0xff]
    %v48 = vld [vmem:[%s0 + $0x78] sm:$0xff]
    %vm49 = vcmask 523264
    %v50 = vsel %vm49, %v33, 0.0
    %51 = vadd.xlane.f32.xlu0 %v50
    %v52 = vpop.xlane.xlu0 %51
    %v53 = vsel %vm49, %v34, 0.0
    %54 = vadd.xlane.f32.xlu0 %v53
    %v55 = vpop.xlane.xlu0 %54
    %v56 = vsel %vm49, %v35, 0.0
    %57 = vadd.xlane.f32.xlu0 %v56
    %v58 = vpop.xlane.xlu0 %57
    %v59 = vsel %vm49, %v36, 0.0
    %60 = vadd.xlane.f32.xlu0 %v59
    %v61 = vpop.xlane.xlu0 %60
    %v62 = vsel %vm49, %v37, 0.0
    %63 = vadd.xlane.f32.xlu0 %v62
    %v64 = vpop.xlane.xlu0 %63
    %v65 = vsel %vm49, %v38, 0.0
    %66 = vadd.xlane.f32.xlu0 %v65
    %v67 = vpop.xlane.xlu0 %66
    %v68 = vsel %vm49, %v39, 0.0
    %69 = vadd.xlane.f32.xlu0 %v68
    %v70 = vpop.xlane.xlu0 %69
    %v71 = vsel %vm49, %v40, 0.0
    %72 = vadd.xlane.f32.xlu0 %v71
    %v73 = vpop.xlane.xlu0 %72
    %v74 = vsel %vm49, %v41, 0.0
    %75 = vadd.xlane.f32.xlu0 %v74
    %v76 = vpop.xlane.xlu0 %75
    %v77 = vsel %vm49, %v42, 0.0
    %78 = vadd.xlane.f32.xlu0 %v77
    %v79 = vpop.xlane.xlu0 %78
    %v80 = vsel %vm49, %v43, 0.0
    %81 = vadd.xlane.f32.xlu0 %v80
    %v82 = vpop.xlane.xlu0 %81
    %v83 = vsel %vm49, %v44, 0.0
    %84 = vadd.xlane.f32.xlu0 %v83
    %v85 = vpop.xlane.xlu0 %84
    %v86 = vsel %vm49, %v45, 0.0
    %87 = vadd.xlane.f32.xlu0 %v86
    %v88 = vpop.xlane.xlu0 %87
    %v89 = vsel %vm49, %v46, 0.0
    %90 = vadd.xlane.f32.xlu0 %v89
    %v91 = vpop.xlane.xlu0 %90
    %v92 = vsel %vm49, %v47, 0.0
    %93 = vadd.xlane.f32.xlu0 %v92
    %v94 = vpop.xlane.xlu0 %93
    %v95 = vsel %vm49, %v48, 0.0
    %96 = vadd.xlane.f32.xlu0 %v95
    %v97 = vpop.xlane.xlu0 %96
    %v98 = vrcp.pop 64.0
    %v99 = vmul.f32 %v52, %v98
    %v100 = vmul.f32 %v55, %v98
    %v101 = vmul.f32 %v58, %v98
    %v102 = vmul.f32 %v61, %v98
    %v103 = vmul.f32 %v64, %v98
    %v104 = vmul.f32 %v67, %v98
    %v105 = vmul.f32 %v70, %v98
    %v106 = vmul.f32 %v73, %v98
    %v107 = vmul.f32 %v76, %v98
    %v108 = vmul.f32 %v79, %v98
    %v109 = vmul.f32 %v82, %v98
    %v110 = vmul.f32 %v85, %v98
    %v111 = vmul.f32 %v88, %v98
    %v112 = vmul.f32 %v91, %v98
    %v113 = vmul.f32 %v94, %v98
    %v114 = vmul.f32 %v97, %v98
    %v115 = vsub.f32 %v33, %v99
    %v116 = vsub.f32 %v34, %v100
    %v117 = vsub.f32 %v35, %v101
    %v118 = vsub.f32 %v36, %v102
    %v119 = vsub.f32 %v37, %v103
    %v120 = vsub.f32 %v38, %v104
    %v121 = vsub.f32 %v39, %v105
    %v122 = vsub.f32 %v40, %v106
    %v123 = vsub.f32 %v41, %v107
    %v124 = vsub.f32 %v42, %v108
    %v125 = vsub.f32 %v43, %v109
    %v126 = vsub.f32 %v44, %v110
    %v127 = vsub.f32 %v45, %v111
    %v128 = vsub.f32 %v46, %v112
    %v129 = vsub.f32 %v47, %v113
    %v130 = vsub.f32 %v48, %v114
    %v131 = vmul.f32 %v115, %v115
    %v132 = vmul.f32 %v116, %v116
    %v133 = vmul.f32 %v117, %v117
    %v134 = vmul.f32 %v118, %v118
    %v135 = vmul.f32 %v119, %v119
    %v136 = vmul.f32 %v120, %v120
    %v137 = vmul.f32 %v121, %v121
    %v138 = vmul.f32 %v122, %v122
    %v139 = vmul.f32 %v123, %v123
    %v140 = vmul.f32 %v124, %v124
    %v141 = vmul.f32 %v125, %v125
    %v142 = vmul.f32 %v126, %v126
    %v143 = vmul.f32 %v127, %v127
    %v144 = vmul.f32 %v128, %v128
    %v145 = vmul.f32 %v129, %v129
    %v146 = vmul.f32 %v130, %v130
    %v147 = vsel %vm49, %v131, 0.0
    %148 = vadd.xlane.f32.xlu0 %v147
    %v149 = vpop.xlane.xlu0 %148
    %v150 = vsel %vm49, %v132, 0.0
    %151 = vadd.xlane.f32.xlu0 %v150
    %v152 = vpop.xlane.xlu0 %151
    %v153 = vsel %vm49, %v133, 0.0
    %154 = vadd.xlane.f32.xlu0 %v153
    %v155 = vpop.xlane.xlu0 %154
    %v156 = vsel %vm49, %v134, 0.0
    %157 = vadd.xlane.f32.xlu0 %v156
    %v158 = vpop.xlane.xlu0 %157
    %v159 = vsel %vm49, %v135, 0.0
    %160 = vadd.xlane.f32.xlu0 %v159
    %v161 = vpop.xlane.xlu0 %160
    %v162 = vsel %vm49, %v136, 0.0
    %163 = vadd.xlane.f32.xlu0 %v162
    %v164 = vpop.xlane.xlu0 %163
    %v165 = vsel %vm49, %v137, 0.0
    %166 = vadd.xlane.f32.xlu0 %v165
    %v167 = vpop.xlane.xlu0 %166
    %v168 = vsel %vm49, %v138, 0.0
    %169 = vadd.xlane.f32.xlu0 %v168
    %v170 = vpop.xlane.xlu0 %169
    %v171 = vsel %vm49, %v139, 0.0
    %172 = vadd.xlane.f32.xlu0 %v171
    %v173 = vpop.xlane.xlu0 %172
    %v174 = vsel %vm49, %v140, 0.0
    %175 = vadd.xlane.f32.xlu0 %v174
    %v176 = vpop.xlane.xlu0 %175
    %v177 = vsel %vm49, %v141, 0.0
    %178 = vadd.xlane.f32.xlu0 %v177
    %v179 = vpop.xlane.xlu0 %178
    %v180 = vsel %vm49, %v142, 0.0
    %181 = vadd.xlane.f32.xlu0 %v180
    %v182 = vpop.xlane.xlu0 %181
    %v183 = vsel %vm49, %v143, 0.0
    %184 = vadd.xlane.f32.xlu0 %v183
    %v185 = vpop.xlane.xlu0 %184
    %v186 = vsel %vm49, %v144, 0.0
    %187 = vadd.xlane.f32.xlu0 %v186
    %v188 = vpop.xlane.xlu0 %187
    %v189 = vsel %vm49, %v145, 0.0
    %190 = vadd.xlane.f32.xlu0 %v189
    %v191 = vpop.xlane.xlu0 %190
    %v192 = vsel %vm49, %v146, 0.0
    %193 = vadd.xlane.f32.xlu0 %v192
    %v194 = vpop.xlane.xlu0 %193
    %v195 = vmul.f32 %v149, %v98
    %v196 = vmul.f32 %v152, %v98
    %v197 = vmul.f32 %v155, %v98
    %v198 = vmul.f32 %v158, %v98
    %v199 = vmul.f32 %v161, %v98
    %v200 = vmul.f32 %v164, %v98
    %v201 = vmul.f32 %v167, %v98
    %v202 = vmul.f32 %v170, %v98
    %v203 = vmul.f32 %v173, %v98
    %v204 = vmul.f32 %v176, %v98
    %v205 = vmul.f32 %v179, %v98
    %v206 = vmul.f32 %v182, %v98
    %v207 = vmul.f32 %v185, %v98
    %v208 = vmul.f32 %v188, %v98
    %v209 = vmul.f32 %v191, %v98
    %v210 = vmul.f32 %v194, %v98
    %v211 = vadd.f32 %v195, 1e-05
    %v212 = vadd.f32 %v196, 1e-05
    %v213 = vadd.f32 %v197, 1e-05
    %v214 = vadd.f32 %v198, 1e-05
    %v215 = vadd.f32 %v199, 1e-05
    %v216 = vadd.f32 %v200, 1e-05
    %v217 = vadd.f32 %v201, 1e-05
    %v218 = vadd.f32 %v202, 1e-05
    %v219 = vadd.f32 %v203, 1e-05
    %v220 = vadd.f32 %v204, 1e-05
    %v221 = vadd.f32 %v205, 1e-05
    %v222 = vadd.f32 %v206, 1e-05
    %v223 = vadd.f32 %v207, 1e-05
    %v224 = vadd.f32 %v208, 1e-05
    %v225 = vadd.f32 %v209, 1e-05
    %v226 = vadd.f32 %v210, 1e-05
    %v227 = vrsqrt.pop %v211
    %v228 = vrsqrt.pop %v212
    %v229 = vrsqrt.pop %v213
    %v230 = vrsqrt.pop %v214
    %v231 = vrsqrt.pop %v215
    %v232 = vrsqrt.pop %v216
    %v233 = vrsqrt.pop %v217
    %v234 = vrsqrt.pop %v218
    %v235 = vrsqrt.pop %v219
    %v236 = vrsqrt.pop %v220
    %v237 = vrsqrt.pop %v221
    %v238 = vrsqrt.pop %v222
    %v239 = vrsqrt.pop %v223
    %v240 = vrsqrt.pop %v224
    %v241 = vrsqrt.pop %v225
    %v242 = vrsqrt.pop %v226
    %v243 = vmul.f32 %v115, %v227
    %v244 = vmul.f32 %v116, %v228
    %v245 = vmul.f32 %v117, %v229
    %v246 = vmul.f32 %v118, %v230
    %v247 = vmul.f32 %v119, %v231
    %v248 = vmul.f32 %v120, %v232
    %v249 = vmul.f32 %v121, %v233
    %v250 = vmul.f32 %v122, %v234
    %v251 = vmul.f32 %v123, %v235
    %v252 = vmul.f32 %v124, %v236
    %v253 = vmul.f32 %v125, %v237
    %v254 = vmul.f32 %v126, %v238
    %v255 = vmul.f32 %v127, %v239
    %v256 = vmul.f32 %v128, %v240
    %v257 = vmul.f32 %v129, %v241
    %v258 = vmul.f32 %v130, %v242
    %v259 = vld [vmem:[%s1] sm:$0x1]
    %v261 = vlaneseq
    %v262 = vshrl.u32 %v261, 7
    %v263 = vsub.s32 0, %v262
    %v264 = vrot.slane %v259, %v263
    %v266 = vmul.f32 %v243, %v264
    %v267 = vmul.f32 %v244, %v264
    %v268 = vmul.f32 %v245, %v264
    %v269 = vmul.f32 %v246, %v264
    %v270 = vmul.f32 %v247, %v264
    %v271 = vmul.f32 %v248, %v264
    %v272 = vmul.f32 %v249, %v264
    %v273 = vmul.f32 %v250, %v264
    %v274 = vmul.f32 %v251, %v264
    %v275 = vmul.f32 %v252, %v264
    %v276 = vmul.f32 %v253, %v264
    %v277 = vmul.f32 %v254, %v264
    %v278 = vmul.f32 %v255, %v264
    %v279 = vmul.f32 %v256, %v264
    %v280 = vmul.f32 %v257, %v264
    %v281 = vmul.f32 %v258, %v264
    %v282 = vld [vmem:[%s2] sm:$0x1]
    %v284 = vlaneseq
    %v285 = vshrl.u32 %v284, 7
    %v286 = vsub.s32 0, %v285
    %v287 = vrot.slane %v282, %v286
    %v289 = vadd.f32 %v266, %v287
    %v290 = vadd.f32 %v267, %v287
    %v291 = vadd.f32 %v268, %v287
    %v292 = vadd.f32 %v269, %v287
    %v293 = vadd.f32 %v270, %v287
    %v294 = vadd.f32 %v271, %v287
    %v295 = vadd.f32 %v272, %v287
    %v296 = vadd.f32 %v273, %v287
    %v297 = vadd.f32 %v274, %v287
    %v298 = vadd.f32 %v275, %v287
    %v299 = vadd.f32 %v276, %v287
    %v300 = vadd.f32 %v277, %v287
    %v301 = vadd.f32 %v278, %v287
    %v302 = vadd.f32 %v279, %v287
    %v303 = vadd.f32 %v280, %v287
    %v304 = vadd.f32 %v281, %v287
    %v305 = vld [vmem:[%s3] sm:$0xff]
    %v306 = vld [vmem:[%s3 + $0x8] sm:$0xff]
    %v307 = vld [vmem:[%s3 + $0x10] sm:$0xff]
    %v308 = vld [vmem:[%s3 + $0x18] sm:$0xff]
    %v309 = vld [vmem:[%s3 + $0x20] sm:$0xff]
    %v310 = vld [vmem:[%s3 + $0x28] sm:$0xff]
    %v311 = vld [vmem:[%s3 + $0x30] sm:$0xff]
    %v312 = vld [vmem:[%s3 + $0x38] sm:$0xff]
    %v313 = vld [vmem:[%s3 + $0x40] sm:$0xff]
    %v314 = vld [vmem:[%s3 + $0x48] sm:$0xff]
    %v315 = vld [vmem:[%s3 + $0x50] sm:$0xff]
    %v316 = vld [vmem:[%s3 + $0x58] sm:$0xff]
    %v317 = vld [vmem:[%s3 + $0x60] sm:$0xff]
    %v318 = vld [vmem:[%s3 + $0x68] sm:$0xff]
    %v319 = vld [vmem:[%s3 + $0x70] sm:$0xff]
    %v320 = vld [vmem:[%s3 + $0x78] sm:$0xff]
    %v321 = vld [vmem:[%s3 + $0x80] sm:$0xff]
    %v322 = vld [vmem:[%s3 + $0x88] sm:$0xff]
    %v323 = vld [vmem:[%s3 + $0x90] sm:$0xff]
    %v324 = vld [vmem:[%s3 + $0x98] sm:$0xff]
    %v325 = vld [vmem:[%s3 + $0xa0] sm:$0xff]
    %v326 = vld [vmem:[%s3 + $0xa8] sm:$0xff]
    %v327 = vld [vmem:[%s3 + $0xb0] sm:$0xff]
    %v328 = vld [vmem:[%s3 + $0xb8] sm:$0xff]
    %v329 = vld [vmem:[%s4] sm:$0x7]
    %v331 = vlaneseq
    %v332 = vshrl.u32 %v331, 7
    %v333 = vsub.s32 0, %v332
    %v334 = vrot.slane %v329, %v333
    %v335 = vlaneseq
    %v336 = vshrl.u32 %v335, 7
    %v337 = vsub.s32 1, %v336
    %v338 = vrot.slane %v329, %v337
    %v339 = vlaneseq
    %v340 = vshrl.u32 %v339, 7
    %v341 = vsub.s32 2, %v340
    %v342 = vrot.slane %v329, %v341
    %v347 = vsel %vm49, %v289, 0
    %v350 = vsel %vm49, %v290, 0
    %v353 = vsel %vm49, %v291, 0
    %v356 = vsel %vm49, %v292, 0
    %v359 = vsel %vm49, %v293, 0
    %v362 = vsel %vm49, %v294, 0
    %v365 = vsel %vm49, %v295, 0
    %v368 = vsel %vm49, %v296, 0
    %v371 = vsel %vm49, %v297, 0
    %v374 = vsel %vm49, %v298, 0
    %v377 = vsel %vm49, %v299, 0
    %v380 = vsel %vm49, %v300, 0
    %v383 = vsel %vm49, %v301, 0
    %v386 = vsel %vm49, %v302, 0
    %v389 = vsel %vm49, %v303, 0
    %v392 = vsel %vm49, %v304, 0
    %394 = vmatprep.subr.mxu0 %v306
    %395 = vmatpush1.msra.mxu0 %v305
    %396 = vmatprep.subr.mxu0 %v309
    %397 = vmatpush1.msra.mxu0 %v308
    %398 = vmatprep.subr.mxu0 %v312
    %399 = vmatpush1.msra.mxu0 %v311
    %400 = vmatprep.subr.mxu0 %v315
    %401 = vmatpush1.msra.mxu0 %v314
    %402 = vmatprep.subr.mxu0 %v318
    %403 = vmatpush1.msra.mxu0 %v317
    %404 = vmatprep.subr.mxu0 %v321
    %405 = vmatpush1.msra.mxu0 %v320
    %406 = vmatprep.subr.mxu0 %v324
    %407 = vmatpush1.msra.mxu0 %v323
    %408 = vmatprep.subr.mxu0 %v327
    %409 = vmatpush1.msra.mxu0 %v326
    %410 = vmatprep.subr.mxu0 0.0
    %411 = vmatpush1.msra.mxu0 0.0
    %412 = vmatprep.subr.mxu0 0.0
    %413 = vmatpush1.msra.mxu0 0.0
    %414 = vmatprep.subr.mxu0 0.0
    %415 = vmatpush1.msra.mxu0 0.0
    %416 = vmatprep.subr.mxu0 0.0
    %417 = vmatpush1.msra.mxu0 0.0
    %418 = vmatprep.subr.mxu0 0.0
    %419 = vmatpush1.msra.mxu0 0.0
    %420 = vmatprep.subr.mxu0 0.0
    %421 = vmatpush1.msra.mxu0 0.0
    %422 = vmatprep.subr.mxu0 0.0
    %423 = vmatpush1.msra.mxu0 0.0
    %424 = vmatprep.subr.mxu0 0.0
    %425 = vmatpush1.msra.mxu0 0.0
    %426 = vmatprep.subr.mxu0 0.0
    %427 = vmatpush1.msra.mxu0 0.0
    %428 = vmatprep.subr.mxu0 0.0
    %429 = vmatpush1.msra.mxu0 0.0
    %430 = vmatprep.subr.mxu0 0.0
    %431 = vmatpush1.msra.mxu0 0.0
    %432 = vmatprep.subr.mxu0 0.0
    %433 = vmatpush1.msra.mxu0 0.0
    %434 = vmatprep.subr.mxu0 0.0
    %435 = vmatpush1.msra.mxu0 0.0
    %436 = vmatprep.subr.mxu0 0.0
    %437 = vmatpush1.msra.mxu0 0.0
    %438 = vmatprep.subr.mxu0 0.0
    %439 = vmatpush1.msra.mxu0 0.0
    %440 = vmatprep.subr.mxu0 0.0
    %441 = vmatpush1.msra.mxu0 0.0
    %442 = vmatprep.subr.mxu0 0.0
    %443 = vmatpush1.msra.mxu0 0.0
    %444 = vmatprep.subr.mxu0 0.0
    %445 = vmatpush1.msra.mxu0 0.0
    %446 = vmatprep.subr.mxu0 0.0
    %447 = vmatpush1.msra.mxu0 0.0
    %448 = vmatprep.subr.mxu0 0.0
    %449 = vmatpush1.msra.mxu0 0.0
    %450 = vmatprep.subr.mxu0 0.0
    %451 = vmatpush1.msra.mxu0 0.0
    %452 = vmatprep.subr.mxu0 0.0
    %453 = vmatpush1.msra.mxu0 0.0
    %454 = vmatprep.subr.mxu0 0.0
    %455 = vmatpush1.msra.mxu0 0.0
    %456 = vmatprep.subr.mxu0 0.0
    %457 = vmatpush1.msra.mxu0 0.0
    %458 = vmatprep.mubr.f32.mxu0 0.0
    %459 = vmatmul.mubr.f32.gmra.mrb[0].mxu0 %v347
    %v460 = vpop.f32.mrb[0].mxu0
    %v461 = vadd.f32 %v334, %v460
    %v462 = vpop.f32.mrb[0].mxu0
    %v463 = vadd.f32 %v338, %v462
    %464 = vmatprep.mubr.f32.mxu0 0.0
    %465 = vmatmul.mubr.f32.gmra.mrb[0].mxu0 %v350
    %v466 = vpop.f32.mrb[0].mxu0
    %v467 = vadd.f32 %v334, %v466
    %v468 = vpop.f32.mrb[0].mxu0
    %v469 = vadd.f32 %v338, %v468
    %470 = vmatprep.mubr.f32.mxu0 0.0
    %471 = vmatmul.mubr.f32.gmra.mrb[0].mxu0 %v353
    %v472 = vpop.f32.mrb[0].mxu0
    %v473 = vadd.f32 %v334, %v472
    %v474 = vpop.f32.mrb[0].mxu0
    %v475 = vadd.f32 %v338, %v474
    %476 = vmatprep.mubr.f32.mxu0 0.0
    %477 = vmatmul.mubr.f32.gmra.mrb[0].mxu0 %v356
    %v478 = vpop.f32.mrb[0].mxu0
    %v479 = vadd.f32 %v334, %v478
    %v480 = vpop.f32.mrb[0].mxu0
    %v481 = vadd.f32 %v338, %v480
    %482 = vmatprep.mubr.f32.mxu0 0.0
    %483 = vmatmul.mubr.f32.gmra.mrb[0].mxu0 %v359
    %v484 = vpop.f32.mrb[0].mxu0
    %v485 = vadd.f32 %v334, %v484
    %v486 = vpop.f32.mrb[0].mxu0
    %v487 = vadd.f32 %v338, %v486
    %488 = vmatprep.mubr.f32.mxu0 0.0
    %489 = vmatmul.mubr.f32.gmra.mrb[0].mxu0 %v362
    %v490 = vpop.f32.mrb[0].mxu0
    %v491 = vadd.f32 %v334, %v490
    %v492 = vpop.f32.mrb[0].mxu0
    %v493 = vadd.f32 %v338, %v492
    %494 = vmatprep.mubr.f32.mxu0 0.0
    %495 = vmatmul.mubr.f32.gmra.mrb[0].mxu0 %v365
    %v496 = vpop.f32.mrb[0].mxu0
    %v497 = vadd.f32 %v334, %v496
    %v498 = vpop.f32.mrb[0].mxu0
    %v499 = vadd.f32 %v338, %v498
    %500 = vmatprep.mubr.f32.mxu0 0.0
    %501 = vmatmul.mubr.f32.gmra.mrb[0].mxu0 %v368
    %v502 = vpop.f32.mrb[0].mxu0
    %v503 = vadd.f32 %v334, %v502
    %v504 = vpop.f32.mrb[0].mxu0
    %v505 = vadd.f32 %v338, %v504
    %506 = vmatprep.mubr.f32.mxu0 0.0
    %507 = vmatmul.mubr.f32.gmra.mrb[0].mxu0 %v371
    %v508 = vpop.f32.mrb[0].mxu0
    %v509 = vadd.f32 %v334, %v508
    %v510 = vpop.f32.mrb[0].mxu0
    %v511 = vadd.f32 %v338, %v510
    %512 = vmatprep.mubr.f32.mxu0 0.0
    %513 = vmatmul.mubr.f32.gmra.mrb[0].mxu0 %v374
    %v514 = vpop.f32.mrb[0].mxu0
    %v515 = vadd.f32 %v334, %v514
    %v516 = vpop.f32.mrb[0].mxu0
    %v517 = vadd.f32 %v338, %v516
    %518 = vmatprep.mubr.f32.mxu0 0.0
    %519 = vmatmul.mubr.f32.gmra.mrb[0].mxu0 %v377
    %v520 = vpop.f32.mrb[0].mxu0
    %v521 = vadd.f32 %v334, %v520
    %v522 = vpop.f32.mrb[0].mxu0
    %v523 = vadd.f32 %v338, %v522
    %524 = vmatprep.mubr.f32.mxu0 0.0
    %525 = vmatmul.mubr.f32.gmra.mrb[0].mxu0 %v380
    %v526 = vpop.f32.mrb[0].mxu0
    %v527 = vadd.f32 %v334, %v526
    %v528 = vpop.f32.mrb[0].mxu0
    %v529 = vadd.f32 %v338, %v528
    %530 = vmatprep.mubr.f32.mxu0 0.0
    %531 = vmatmul.mubr.f32.gmra.mrb[0].mxu0 %v383
    %v532 = vpop.f32.mrb[0].mxu0
    %v533 = vadd.f32 %v334, %v532
    %v534 = vpop.f32.mrb[0].mxu0
    %v535 = vadd.f32 %v338, %v534
    %536 = vmatprep.mubr.f32.mxu0 0.0
    %537 = vmatmul.mubr.f32.gmra.mrb[0].mxu0 %v386
    %v538 = vpop.f32.mrb[0].mxu0
    %v539 = vadd.f32 %v334, %v538
    %v540 = vpop.f32.mrb[0].mxu0
    %v541 = vadd.f32 %v338, %v540
    %542 = vmatprep.mubr.f32.mxu0 0.0
    %543 = vmatmul.mubr.f32.gmra.mrb[0].mxu0 %v389
    %v544 = vpop.f32.mrb[0].mxu0
    %v545 = vadd.f32 %v334, %v544
    %v546 = vpop.f32.mrb[0].mxu0
    %v547 = vadd.f32 %v338, %v546
    %548 = vmatprep.mubr.f32.mxu0 0.0
    %549 = vmatmul.mubr.f32.gmra.mrb[0].mxu0 %v392
    %v550 = vpop.f32.mrb[0].mxu0
    %v551 = vadd.f32 %v334, %v550
    %v552 = vpop.f32.mrb[0].mxu0
    %v553 = vadd.f32 %v338, %v552
    %554 = vdwg.mxu0
    %555 = vmatprep.subr.mxu0 0.0
    %556 = vmatpush1.msra.mxu0 %v307
    %557 = vmatprep.subr.mxu0 0.0
    %558 = vmatpush1.msra.mxu0 %v310
    %559 = vmatprep.subr.mxu0 0.0
    %560 = vmatpush1.msra.mxu0 %v313
    %561 = vmatprep.subr.mxu0 0.0
    %562 = vmatpush1.msra.mxu0 %v316
    %563 = vmatprep.subr.mxu0 0.0
    %564 = vmatpush1.msra.mxu0 %v319
    %565 = vmatprep.subr.mxu0 0.0
    %566 = vmatpush1.msra.mxu0 %v322
    %567 = vmatprep.subr.mxu0 0.0
    %568 = vmatpush1.msra.mxu0 %v325
    %569 = vmatprep.subr.mxu0 0.0
    %570 = vmatpush1.msra.mxu0 %v328
    %571 = vmatprep.subr.mxu0 0.0
    %572 = vmatpush1.msra.mxu0 0.0
    %573 = vmatprep.subr.mxu0 0.0
    %574 = vmatpush1.msra.mxu0 0.0
    %575 = vmatprep.subr.mxu0 0.0
    %576 = vmatpush1.msra.mxu0 0.0
    %577 = vmatprep.subr.mxu0 0.0
    %578 = vmatpush1.msra.mxu0 0.0
    %579 = vmatprep.subr.mxu0 0.0
    %580 = vmatpush1.msra.mxu0 0.0
    %581 = vmatprep.subr.mxu0 0.0
    %582 = vmatpush1.msra.mxu0 0.0
    %583 = vmatprep.subr.mxu0 0.0
    %584 = vmatpush1.msra.mxu0 0.0
    %585 = vmatprep.subr.mxu0 0.0
    %586 = vmatpush1.msra.mxu0 0.0
    %587 = vmatprep.subr.mxu0 0.0
    %588 = vmatpush1.msra.mxu0 0.0
    %589 = vmatprep.subr.mxu0 0.0
    %590 = vmatpush1.msra.mxu0 0.0
    %591 = vmatprep.subr.mxu0 0.0
    %592 = vmatpush1.msra.mxu0 0.0
    %593 = vmatprep.subr.mxu0 0.0
    %594 = vmatpush1.msra.mxu0 0.0
    %595 = vmatprep.subr.mxu0 0.0
    %596 = vmatpush1.msra.mxu0 0.0
    %597 = vmatprep.subr.mxu0 0.0
    %598 = vmatpush1.msra.mxu0 0.0
    %599 = vmatprep.subr.mxu0 0.0
    %600 = vmatpush1.msra.mxu0 0.0
    %601 = vmatprep.subr.mxu0 0.0
    %602 = vmatpush1.msra.mxu0 0.0
    %603 = vmatprep.subr.mxu0 0.0
    %604 = vmatpush1.msra.mxu0 0.0
    %605 = vmatprep.subr.mxu0 0.0
    %606 = vmatpush1.msra.mxu0 0.0
    %607 = vmatprep.subr.mxu0 0.0
    %608 = vmatpush1.msra.mxu0 0.0
    %609 = vmatprep.subr.mxu0 0.0
    %610 = vmatpush1.msra.mxu0 0.0
    %611 = vmatprep.subr.mxu0 0.0
    %612 = vmatpush1.msra.mxu0 0.0
    %613 = vmatprep.subr.mxu0 0.0
    %614 = vmatpush1.msra.mxu0 0.0
    %615 = vmatprep.subr.mxu0 0.0
    %616 = vmatpush1.msra.mxu0 0.0
    %617 = vmatprep.subr.mxu0 0.0
    %618 = vmatpush1.msra.mxu0 0.0
    %619 = vmatprep.mubr.f32.mxu0 0.0
    %620 = vmatmul.mubr.f32.gmra.mrb[0].mxu0 %v347
    %v621 = vpop.f32.mrb[0].mxu0
    %v622 = vadd.f32 %v342, %v621
    %v623 = vpop.f32.mrb[0].mxu0
    %624 = vmatprep.mubr.f32.mxu0 0.0
    %625 = vmatmul.mubr.f32.gmra.mrb[0].mxu0 %v350
    %v626 = vpop.f32.mrb[0].mxu0
    %v627 = vadd.f32 %v342, %v626
    %v628 = vpop.f32.mrb[0].mxu0
    %629 = vmatprep.mubr.f32.mxu0 0.0
    %630 = vmatmul.mubr.f32.gmra.mrb[0].mxu0 %v353
    %v631 = vpop.f32.mrb[0].mxu0
    %v632 = vadd.f32 %v342, %v631
    %v633 = vpop.f32.mrb[0].mxu0
    %634 = vmatprep.mubr.f32.mxu0 0.0
    %635 = vmatmul.mubr.f32.gmra.mrb[0].mxu0 %v356
    %v636 = vpop.f32.mrb[0].mxu0
    %v637 = vadd.f32 %v342, %v636
    %v638 = vpop.f32.mrb[0].mxu0
    %639 = vmatprep.mubr.f32.mxu0 0.0
    %640 = vmatmul.mubr.f32.gmra.mrb[0].mxu0 %v359
    %v641 = vpop.f32.mrb[0].mxu0
    %v642 = vadd.f32 %v342, %v641
    %v643 = vpop.f32.mrb[0].mxu0
    %644 = vmatprep.mubr.f32.mxu0 0.0
    %645 = vmatmul.mubr.f32.gmra.mrb[0].mxu0 %v362
    %v646 = vpop.f32.mrb[0].mxu0
    %v647 = vadd.f32 %v342, %v646
    %v648 = vpop.f32.mrb[0].mxu0
    %649 = vmatprep.mubr.f32.mxu0 0.0
    %650 = vmatmul.mubr.f32.gmra.mrb[0].mxu0 %v365
    %v651 = vpop.f32.mrb[0].mxu0
    %v652 = vadd.f32 %v342, %v651
    %v653 = vpop.f32.mrb[0].mxu0
    %654 = vmatprep.mubr.f32.mxu0 0.0
    %655 = vmatmul.mubr.f32.gmra.mrb[0].mxu0 %v368
    %v656 = vpop.f32.mrb[0].mxu0
    %v657 = vadd.f32 %v342, %v656
    %v658 = vpop.f32.mrb[0].mxu0
    %659 = vmatprep.mubr.f32.mxu0 0.0
    %660 = vmatmul.mubr.f32.gmra.mrb[0].mxu0 %v371
    %v661 = vpop.f32.mrb[0].mxu0
    %v662 = vadd.f32 %v342, %v661
    %v663 = vpop.f32.mrb[0].mxu0
    %664 = vmatprep.mubr.f32.mxu0 0.0
    %665 = vmatmul.mubr.f32.gmra.mrb[0].mxu0 %v374
    %v666 = vpop.f32.mrb[0].mxu0
    %v667 = vadd.f32 %v342, %v666
    %v668 = vpop.f32.mrb[0].mxu0
    %669 = vmatprep.mubr.f32.mxu0 0.0
    %670 = vmatmul.mubr.f32.gmra.mrb[0].mxu0 %v377
    %v671 = vpop.f32.mrb[0].mxu0
    %v672 = vadd.f32 %v342, %v671
    %v673 = vpop.f32.mrb[0].mxu0
    %674 = vmatprep.mubr.f32.mxu0 0.0
    %675 = vmatmul.mubr.f32.gmra.mrb[0].mxu0 %v380
    %v676 = vpop.f32.mrb[0].mxu0
    %v677 = vadd.f32 %v342, %v676
    %v678 = vpop.f32.mrb[0].mxu0
    %679 = vmatprep.mubr.f32.mxu0 0.0
    %680 = vmatmul.mubr.f32.gmra.mrb[0].mxu0 %v383
    %v681 = vpop.f32.mrb[0].mxu0
    %v682 = vadd.f32 %v342, %v681
    %v683 = vpop.f32.mrb[0].mxu0
    %684 = vmatprep.mubr.f32.mxu0 0.0
    %685 = vmatmul.mubr.f32.gmra.mrb[0].mxu0 %v386
    %v686 = vpop.f32.mrb[0].mxu0
    %v687 = vadd.f32 %v342, %v686
    %v688 = vpop.f32.mrb[0].mxu0
    %689 = vmatprep.mubr.f32.mxu0 0.0
    %690 = vmatmul.mubr.f32.gmra.mrb[0].mxu0 %v389
    %v691 = vpop.f32.mrb[0].mxu0
    %v692 = vadd.f32 %v342, %v691
    %v693 = vpop.f32.mrb[0].mxu0
    %694 = vmatprep.mubr.f32.mxu0 0.0
    %695 = vmatmul.mubr.f32.gmra.mrb[0].mxu0 %v392
    %v696 = vpop.f32.mrb[0].mxu0
    %v697 = vadd.f32 %v342, %v696
    %v698 = vpop.f32.mrb[0].mxu0
    %699 = vdwg.mxu0
    %v700 = vld [vmem:[%s5] sm:$0xff]
    %v701 = vld [vmem:[%s5 + $0x8] sm:$0xff]
    %v702 = vld [vmem:[%s5 + $0x10] sm:$0xff]
    %v703 = vld [vmem:[%s5 + $0x18] sm:$0xff]
    %v704 = vld [vmem:[%s5 + $0x20] sm:$0xff]
    %v705 = vld [vmem:[%s5 + $0x28] sm:$0xff]
    %v706 = vld [vmem:[%s5 + $0x30] sm:$0xff]
    %v707 = vld [vmem:[%s5 + $0x38] sm:$0xff]
    %v708 = vld [vmem:[%s5 + $0x40] sm:$0xff]
    %v709 = vld [vmem:[%s5 + $0x48] sm:$0xff]
    %v710 = vld [vmem:[%s5 + $0x50] sm:$0xff]
    %v711 = vld [vmem:[%s5 + $0x58] sm:$0xff]
    %v712 = vld [vmem:[%s5 + $0x60] sm:$0xff]
    %v713 = vld [vmem:[%s5 + $0x68] sm:$0xff]
    %v714 = vld [vmem:[%s5 + $0x70] sm:$0xff]
    %v715 = vld [vmem:[%s5 + $0x78] sm:$0xff]
    %v716 = vmul.f32 %v461, %v700
    %v717 = vmul.f32 %v467, %v701
    %v718 = vmul.f32 %v473, %v702
    %v719 = vmul.f32 %v479, %v703
    %v720 = vmul.f32 %v485, %v704
    %v721 = vmul.f32 %v491, %v705
    %v722 = vmul.f32 %v497, %v706
    %v723 = vmul.f32 %v503, %v707
    %v724 = vmul.f32 %v509, %v708
    %v725 = vmul.f32 %v515, %v709
    %v726 = vmul.f32 %v521, %v710
    %v727 = vmul.f32 %v527, %v711
    %v728 = vmul.f32 %v533, %v712
    %v729 = vmul.f32 %v539, %v713
    %v730 = vmul.f32 %v545, %v714
    %v731 = vmul.f32 %v551, %v715
    %v732 = vld [vmem:[%s6] sm:$0xff]
    %v733 = vld [vmem:[%s6 + $0x8] sm:$0xff]
    %v734 = vld [vmem:[%s6 + $0x10] sm:$0xff]
    %v735 = vld [vmem:[%s6 + $0x18] sm:$0xff]
    %v736 = vld [vmem:[%s6 + $0x20] sm:$0xff]
    %v737 = vld [vmem:[%s6 + $0x28] sm:$0xff]
    %v738 = vld [vmem:[%s6 + $0x30] sm:$0xff]
    %v739 = vld [vmem:[%s6 + $0x38] sm:$0xff]
    %v740 = vld [vmem:[%s6 + $0x40] sm:$0xff]
    %v741 = vld [vmem:[%s6 + $0x48] sm:$0xff]
    %v742 = vld [vmem:[%s6 + $0x50] sm:$0xff]
    %v743 = vld [vmem:[%s6 + $0x58] sm:$0xff]
    %v744 = vld [vmem:[%s6 + $0x60] sm:$0xff]
    %v745 = vld [vmem:[%s6 + $0x68] sm:$0xff]
    %v746 = vld [vmem:[%s6 + $0x70] sm:$0xff]
    %v747 = vld [vmem:[%s6 + $0x78] sm:$0xff]
    %v748 = vmul.f32 %v463, %v732
    %v749 = vmul.f32 %v469, %v733
    %v750 = vmul.f32 %v475, %v734
    %v751 = vmul.f32 %v481, %v735
    %v752 = vmul.f32 %v487, %v736
    %v753 = vmul.f32 %v493, %v737
    %v754 = vmul.f32 %v499, %v738
    %v755 = vmul.f32 %v505, %v739
    %v756 = vmul.f32 %v511, %v740
    %v757 = vmul.f32 %v517, %v741
    %v758 = vmul.f32 %v523, %v742
    %v759 = vmul.f32 %v529, %v743
    %v760 = vmul.f32 %v535, %v744
    %v761 = vmul.f32 %v541, %v745
    %v762 = vmul.f32 %v547, %v746
    %v763 = vmul.f32 %v553, %v747
    %v764 = vadd.f32 %v716, %v748
    %v765 = vadd.f32 %v717, %v749
    %v766 = vadd.f32 %v718, %v750
    %v767 = vadd.f32 %v719, %v751
    %v768 = vadd.f32 %v720, %v752
    %v769 = vadd.f32 %v721, %v753
    %v770 = vadd.f32 %v722, %v754
    %v771 = vadd.f32 %v723, %v755
    %v772 = vadd.f32 %v724, %v756
    %v773 = vadd.f32 %v725, %v757
    %v774 = vadd.f32 %v726, %v758
    %v775 = vadd.f32 %v727, %v759
    %v776 = vadd.f32 %v728, %v760
    %v777 = vadd.f32 %v729, %v761
    %v778 = vadd.f32 %v730, %v762
    %v779 = vadd.f32 %v731, %v763
    %v780 = vlaneseq
    %v781 = vshrl.u32 %v780, 7
    %v782 = vadd.s32 %v781, 8
    %v783 = vadd.s32 %v781, 16
    %v784 = vadd.s32 %v781, 24
    %v785 = vadd.s32 %v781, 32
    %v786 = vadd.s32 %v781, 40
    %v787 = vadd.s32 %v781, 48
    %v788 = vadd.s32 %v781, 56
    %v789 = vlaneseq
    %v790 = vand.u32 %v789, 127
    %vm791 = vcmp.ge.s32.totalorder %v781, %v790
    %vm792 = vcmp.ge.s32.totalorder %v782, %v790
    %vm793 = vcmp.ge.s32.totalorder %v783, %v790
    %vm794 = vcmp.ge.s32.totalorder %v784, %v790
    %vm795 = vcmp.ge.s32.totalorder %v785, %v790
    %vm796 = vcmp.ge.s32.totalorder %v786, %v790
    %vm797 = vcmp.ge.s32.totalorder %v787, %v790
    %vm798 = vcmp.ge.s32.totalorder %v788, %v790
    %v799 = vsel %vm791, 0.0, -1e+30
    %v800 = vsel %vm792, 0.0, -1e+30
    %v801 = vsel %vm793, 0.0, -1e+30
    %v802 = vsel %vm794, 0.0, -1e+30
    %v803 = vsel %vm795, 0.0, -1e+30
    %v804 = vsel %vm796, 0.0, -1e+30
    %v805 = vsel %vm797, 0.0, -1e+30
    %v806 = vsel %vm798, 0.0, -1e+30
    %815 = vrot.lane.b32.xlu0 %v764, 64
    %v816 = vpop.permute.xlu0 %815
    %817 = vrot.lane.b32.xlu0 %v765, 64
    %v818 = vpop.permute.xlu0 %817
    %819 = vrot.lane.b32.xlu0 %v766, 64
    %v820 = vpop.permute.xlu0 %819
    %821 = vrot.lane.b32.xlu0 %v767, 64
    %v822 = vpop.permute.xlu0 %821
    %823 = vrot.lane.b32.xlu0 %v768, 64
    %v824 = vpop.permute.xlu0 %823
    %825 = vrot.lane.b32.xlu0 %v769, 64
    %v826 = vpop.permute.xlu0 %825
    %827 = vrot.lane.b32.xlu0 %v770, 64
    %v828 = vpop.permute.xlu0 %827
    %829 = vrot.lane.b32.xlu0 %v771, 64
    %v830 = vpop.permute.xlu0 %829
    %vm831 = vcmask 261120
    %v832 = vsel %vm831, %v764, 0
    %v834 = vsel %vm831, %v765, 0
    %v836 = vsel %vm831, %v766, 0
    %v838 = vsel %vm831, %v767, 0
    %v840 = vsel %vm831, %v768, 0
    %v842 = vsel %vm831, %v769, 0
    %v844 = vsel %vm831, %v770, 0
    %v846 = vsel %vm831, %v771, 0
    %v848 = vsel %vm831, %v816, 0
    %v850 = vsel %vm831, %v818, 0
    %v852 = vsel %vm831, %v820, 0
    %v854 = vsel %vm831, %v822, 0
    %v856 = vsel %vm831, %v824, 0
    %v858 = vsel %vm831, %v826, 0
    %v860 = vsel %vm831, %v828, 0
    %v862 = vsel %vm831, %v830, 0
    %864 = vmatprep.subr.mxu0 0.0
    %865 = vmatpush1.xpose.msra.mxu0 %v848
    %866 = vmatprep.subr.mxu0 0.0
    %867 = vmatpush1.xpose.msra.mxu0 %v850
    %868 = vmatprep.subr.mxu0 0.0
    %869 = vmatpush1.xpose.msra.mxu0 %v852
    %870 = vmatprep.subr.mxu0 0.0
    %871 = vmatpush1.xpose.msra.mxu0 %v854
    %872 = vmatprep.subr.mxu0 0.0
    %873 = vmatpush1.xpose.msra.mxu0 %v856
    %874 = vmatprep.subr.mxu0 0.0
    %875 = vmatpush1.xpose.msra.mxu0 %v858
    %876 = vmatprep.subr.mxu0 0.0
    %877 = vmatpush1.xpose.msra.mxu0 %v860
    %878 = vmatprep.subr.mxu0 0.0
    %879 = vmatpush1.xpose.msra.mxu0 %v862
    %880 = vmatprep.subr.mxu0 0.0
    %881 = vmatpush1.xpose.msra.mxu0 0.0
    %882 = vmatprep.subr.mxu0 0.0
    %883 = vmatpush1.xpose.msra.mxu0 0.0
    %884 = vmatprep.subr.mxu0 0.0
    %885 = vmatpush1.xpose.msra.mxu0 0.0
    %886 = vmatprep.subr.mxu0 0.0
    %887 = vmatpush1.xpose.msra.mxu0 0.0
    %888 = vmatprep.subr.mxu0 0.0
    %889 = vmatpush1.xpose.msra.mxu0 0.0
    %890 = vmatprep.subr.mxu0 0.0
    %891 = vmatpush1.xpose.msra.mxu0 0.0
    %892 = vmatprep.subr.mxu0 0.0
    %893 = vmatpush1.xpose.msra.mxu0 0.0
    %894 = vmatprep.subr.mxu0 0.0
    %895 = vmatpush1.xpose.msra.mxu0 0.0
    %896 = vmatprep.subr.mxu0 0.0
    %897 = vmatpush1.xpose.msra.mxu0 0.0
    %898 = vmatprep.subr.mxu0 0.0
    %899 = vmatpush1.xpose.msra.mxu0 0.0
    %900 = vmatprep.subr.mxu0 0.0
    %901 = vmatpush1.xpose.msra.mxu0 0.0
    %902 = vmatprep.subr.mxu0 0.0
    %903 = vmatpush1.xpose.msra.mxu0 0.0
    %904 = vmatprep.subr.mxu0 0.0
    %905 = vmatpush1.xpose.msra.mxu0 0.0
    %906 = vmatprep.subr.mxu0 0.0
    %907 = vmatpush1.xpose.msra.mxu0 0.0
    %908 = vmatprep.subr.mxu0 0.0
    %909 = vmatpush1.xpose.msra.mxu0 0.0
    %910 = vmatprep.subr.mxu0 0.0
    %911 = vmatpush1.xpose.msra.mxu0 0.0
    %912 = vmatprep.subr.mxu0 0.0
    %913 = vmatpush1.xpose.msra.mxu0 0.0
    %914 = vmatprep.subr.mxu0 0.0
    %915 = vmatpush1.xpose.msra.mxu0 0.0
    %916 = vmatprep.subr.mxu0 0.0
    %917 = vmatpush1.xpose.msra.mxu0 0.0
    %918 = vmatprep.subr.mxu0 0.0
    %919 = vmatpush1.xpose.msra.mxu0 0.0
    %920 = vmatprep.subr.mxu0 0.0
    %921 = vmatpush1.xpose.msra.mxu0 0.0
    %922 = vmatprep.subr.mxu0 0.0
    %923 = vmatpush1.xpose.msra.mxu0 0.0
    %924 = vmatprep.subr.mxu0 0.0
    %925 = vmatpush1.xpose.msra.mxu0 0.0
    %926 = vmatprep.subr.mxu0 0.0
    %927 = vmatpush1.xpose.msra.mxu0 0.0
    %928 = vmatprep.mubr.f32.mxu0 0.0
    %929 = vmatmul.mubr.f32.gmra.mrb[0].mxu0 %v832
    %v930 = vpop.f32.mrb[0].mxu0
    %v931 = vadd.f32 %v799, %v930
    %v932 = vpop.f32.mrb[0].mxu0
    %933 = vmatprep.mubr.f32.mxu0 0.0
    %934 = vmatmul.mubr.f32.gmra.mrb[0].mxu0 %v834
    %v935 = vpop.f32.mrb[0].mxu0
    %v936 = vadd.f32 %v800, %v935
    %v937 = vpop.f32.mrb[0].mxu0
    %938 = vmatprep.mubr.f32.mxu0 0.0
    %939 = vmatmul.mubr.f32.gmra.mrb[0].mxu0 %v836
    %v940 = vpop.f32.mrb[0].mxu0
    %v941 = vadd.f32 %v801, %v940
    %v942 = vpop.f32.mrb[0].mxu0
    %943 = vmatprep.mubr.f32.mxu0 0.0
    %944 = vmatmul.mubr.f32.gmra.mrb[0].mxu0 %v838
    %v945 = vpop.f32.mrb[0].mxu0
    %v946 = vadd.f32 %v802, %v945
    %v947 = vpop.f32.mrb[0].mxu0
    %948 = vmatprep.mubr.f32.mxu0 0.0
    %949 = vmatmul.mubr.f32.gmra.mrb[0].mxu0 %v840
    %v950 = vpop.f32.mrb[0].mxu0
    %v951 = vadd.f32 %v803, %v950
    %v952 = vpop.f32.mrb[0].mxu0
    %953 = vmatprep.mubr.f32.mxu0 0.0
    %954 = vmatmul.mubr.f32.gmra.mrb[0].mxu0 %v842
    %v955 = vpop.f32.mrb[0].mxu0
    %v956 = vadd.f32 %v804, %v955
    %v957 = vpop.f32.mrb[0].mxu0
    %958 = vmatprep.mubr.f32.mxu0 0.0
    %959 = vmatmul.mubr.f32.gmra.mrb[0].mxu0 %v844
    %v960 = vpop.f32.mrb[0].mxu0
    %v961 = vadd.f32 %v805, %v960
    %v962 = vpop.f32.mrb[0].mxu0
    %963 = vmatprep.mubr.f32.mxu0 0.0
    %964 = vmatmul.mubr.f32.gmra.mrb[0].mxu0 %v846
    %v965 = vpop.f32.mrb[0].mxu0
    %v966 = vadd.f32 %v806, %v965
    %v967 = vpop.f32.mrb[0].mxu0
    %968 = vdwg.mxu0
    %v969 = vsel %vm49, %v931, -inf
    %970 = vmax.xlane.f32.xlu0 %v969
    %v971 = vpop.xlane.xlu0 %970
    %v972 = vsel %vm49, %v936, -inf
    %973 = vmax.xlane.f32.xlu0 %v972
    %v974 = vpop.xlane.xlu0 %973
    %v975 = vsel %vm49, %v941, -inf
    %976 = vmax.xlane.f32.xlu0 %v975
    %v977 = vpop.xlane.xlu0 %976
    %v978 = vsel %vm49, %v946, -inf
    %979 = vmax.xlane.f32.xlu0 %v978
    %v980 = vpop.xlane.xlu0 %979
    %v981 = vsel %vm49, %v951, -inf
    %982 = vmax.xlane.f32.xlu0 %v981
    %v983 = vpop.xlane.xlu0 %982
    %v984 = vsel %vm49, %v956, -inf
    %985 = vmax.xlane.f32.xlu0 %v984
    %v986 = vpop.xlane.xlu0 %985
    %v987 = vsel %vm49, %v961, -inf
    %988 = vmax.xlane.f32.xlu0 %v987
    %v989 = vpop.xlane.xlu0 %988
    %v990 = vsel %vm49, %v966, -inf
    %991 = vmax.xlane.f32.xlu0 %v990
    %v992 = vpop.xlane.xlu0 %991
    %v993 = vsub.f32 %v931, %v971
    %v994 = vsub.f32 %v936, %v974
    %v995 = vsub.f32 %v941, %v977
    %v996 = vsub.f32 %v946, %v980
    %v997 = vsub.f32 %v951, %v983
    %v998 = vsub.f32 %v956, %v986
    %v999 = vsub.f32 %v961, %v989
    %v1000 = vsub.f32 %v966, %v992
    %v1001 = vmul.f32 %v993, 1.442695
    %v1002 = vpow.pop %v1001
    %v1003 = vmul.f32 %v994, 1.442695
    %v1004 = vpow.pop %v1003
    %v1005 = vmul.f32 %v995, 1.442695
    %v1006 = vpow.pop %v1005
    %v1007 = vmul.f32 %v996, 1.442695
    %v1008 = vpow.pop %v1007
    %v1009 = vmul.f32 %v997, 1.442695
    %v1010 = vpow.pop %v1009
    %v1011 = vmul.f32 %v998, 1.442695
    %v1012 = vpow.pop %v1011
    %v1013 = vmul.f32 %v999, 1.442695
    %v1014 = vpow.pop %v1013
    %v1015 = vmul.f32 %v1000, 1.442695
    %v1016 = vpow.pop %v1015
    %v1017 = vsel %vm49, %v1002, 0.0
    %1018 = vadd.xlane.f32.xlu0 %v1017
    %v1019 = vpop.xlane.xlu0 %1018
    %v1020 = vsel %vm49, %v1004, 0.0
    %1021 = vadd.xlane.f32.xlu0 %v1020
    %v1022 = vpop.xlane.xlu0 %1021
    %v1023 = vsel %vm49, %v1006, 0.0
    %1024 = vadd.xlane.f32.xlu0 %v1023
    %v1025 = vpop.xlane.xlu0 %1024
    %v1026 = vsel %vm49, %v1008, 0.0
    %1027 = vadd.xlane.f32.xlu0 %v1026
    %v1028 = vpop.xlane.xlu0 %1027
    %v1029 = vsel %vm49, %v1010, 0.0
    %1030 = vadd.xlane.f32.xlu0 %v1029
    %v1031 = vpop.xlane.xlu0 %1030
    %v1032 = vsel %vm49, %v1012, 0.0
    %1033 = vadd.xlane.f32.xlu0 %v1032
    %v1034 = vpop.xlane.xlu0 %1033
    %v1035 = vsel %vm49, %v1014, 0.0
    %1036 = vadd.xlane.f32.xlu0 %v1035
    %v1037 = vpop.xlane.xlu0 %1036
    %v1038 = vsel %vm49, %v1016, 0.0
    %1039 = vadd.xlane.f32.xlu0 %v1038
    %v1040 = vpop.xlane.xlu0 %1039
    %v1042 = vsel %vm49, %v1002, 0
    %v1045 = vsel %vm49, %v1004, 0
    %v1048 = vsel %vm49, %v1006, 0
    %v1051 = vsel %vm49, %v1008, 0
    %v1054 = vsel %vm49, %v1010, 0
    %v1057 = vsel %vm49, %v1012, 0
    %v1060 = vsel %vm49, %v1014, 0
    %v1063 = vsel %vm49, %v1016, 0
    %1065 = vmatprep.subr.mxu0 0.0
    %1066 = vmatpush1.msra.mxu0 %v622
    %1067 = vmatprep.subr.mxu0 0.0
    %1068 = vmatpush1.msra.mxu0 %v627
    %1069 = vmatprep.subr.mxu0 0.0
    %1070 = vmatpush1.msra.mxu0 %v632
    %1071 = vmatprep.subr.mxu0 0.0
    %1072 = vmatpush1.msra.mxu0 %v637
    %1073 = vmatprep.subr.mxu0 0.0
    %1074 = vmatpush1.msra.mxu0 %v642
    %1075 = vmatprep.subr.mxu0 0.0
    %1076 = vmatpush1.msra.mxu0 %v647
    %1077 = vmatprep.subr.mxu0 0.0
    %1078 = vmatpush1.msra.mxu0 %v652
    %1079 = vmatprep.subr.mxu0 0.0
    %1080 = vmatpush1.msra.mxu0 %v657
    %1081 = vmatprep.subr.mxu0 0.0
    %1082 = vmatpush1.msra.mxu0 0.0
    %1083 = vmatprep.subr.mxu0 0.0
    %1084 = vmatpush1.msra.mxu0 0.0
    %1085 = vmatprep.subr.mxu0 0.0
    %1086 = vmatpush1.msra.mxu0 0.0
    %1087 = vmatprep.subr.mxu0 0.0
    %1088 = vmatpush1.msra.mxu0 0.0
    %1089 = vmatprep.subr.mxu0 0.0
    %1090 = vmatpush1.msra.mxu0 0.0
    %1091 = vmatprep.subr.mxu0 0.0
    %1092 = vmatpush1.msra.mxu0 0.0
    %1093 = vmatprep.subr.mxu0 0.0
    %1094 = vmatpush1.msra.mxu0 0.0
    %1095 = vmatprep.subr.mxu0 0.0
    %1096 = vmatpush1.msra.mxu0 0.0
    %1097 = vmatprep.subr.mxu0 0.0
    %1098 = vmatpush1.msra.mxu0 0.0
    %1099 = vmatprep.subr.mxu0 0.0
    %1100 = vmatpush1.msra.mxu0 0.0
    %1101 = vmatprep.subr.mxu0 0.0
    %1102 = vmatpush1.msra.mxu0 0.0
    %1103 = vmatprep.subr.mxu0 0.0
    %1104 = vmatpush1.msra.mxu0 0.0
    %1105 = vmatprep.subr.mxu0 0.0
    %1106 = vmatpush1.msra.mxu0 0.0
    %1107 = vmatprep.subr.mxu0 0.0
    %1108 = vmatpush1.msra.mxu0 0.0
    %1109 = vmatprep.subr.mxu0 0.0
    %1110 = vmatpush1.msra.mxu0 0.0
    %1111 = vmatprep.subr.mxu0 0.0
    %1112 = vmatpush1.msra.mxu0 0.0
    %1113 = vmatprep.subr.mxu0 0.0
    %1114 = vmatpush1.msra.mxu0 0.0
    %1115 = vmatprep.subr.mxu0 0.0
    %1116 = vmatpush1.msra.mxu0 0.0
    %1117 = vmatprep.subr.mxu0 0.0
    %1118 = vmatpush1.msra.mxu0 0.0
    %1119 = vmatprep.subr.mxu0 0.0
    %1120 = vmatpush1.msra.mxu0 0.0
    %1121 = vmatprep.subr.mxu0 0.0
    %1122 = vmatpush1.msra.mxu0 0.0
    %1123 = vmatprep.subr.mxu0 0.0
    %1124 = vmatpush1.msra.mxu0 0.0
    %1125 = vmatprep.subr.mxu0 0.0
    %1126 = vmatpush1.msra.mxu0 0.0
    %1127 = vmatprep.subr.mxu0 0.0
    %1128 = vmatpush1.msra.mxu0 0.0
    %1129 = vmatprep.mubr.f32.mxu0 0.0
    %1130 = vmatmul.mubr.f32.gmra.mrb[0].mxu0 %v1042
    %v1131 = vpop.f32.mrb[0].mxu0
    %v1132 = vadd.f32 0.0, %v1131
    %v1133 = vpop.f32.mrb[0].mxu0
    %1134 = vmatprep.mubr.f32.mxu0 0.0
    %1135 = vmatmul.mubr.f32.gmra.mrb[0].mxu0 %v1045
    %v1136 = vpop.f32.mrb[0].mxu0
    %v1137 = vadd.f32 0.0, %v1136
    %v1138 = vpop.f32.mrb[0].mxu0
    %1139 = vmatprep.mubr.f32.mxu0 0.0
    %1140 = vmatmul.mubr.f32.gmra.mrb[0].mxu0 %v1048
    %v1141 = vpop.f32.mrb[0].mxu0
    %v1142 = vadd.f32 0.0, %v1141
    %v1143 = vpop.f32.mrb[0].mxu0
    %1144 = vmatprep.mubr.f32.mxu0 0.0
    %1145 = vmatmul.mubr.f32.gmra.mrb[0].mxu0 %v1051
    %v1146 = vpop.f32.mrb[0].mxu0
    %v1147 = vadd.f32 0.0, %v1146
    %v1148 = vpop.f32.mrb[0].mxu0
    %1149 = vmatprep.mubr.f32.mxu0 0.0
    %1150 = vmatmul.mubr.f32.gmra.mrb[0].mxu0 %v1054
    %v1151 = vpop.f32.mrb[0].mxu0
    %v1152 = vadd.f32 0.0, %v1151
    %v1153 = vpop.f32.mrb[0].mxu0
    %1154 = vmatprep.mubr.f32.mxu0 0.0
    %1155 = vmatmul.mubr.f32.gmra.mrb[0].mxu0 %v1057
    %v1156 = vpop.f32.mrb[0].mxu0
    %v1157 = vadd.f32 0.0, %v1156
    %v1158 = vpop.f32.mrb[0].mxu0
    %1159 = vmatprep.mubr.f32.mxu0 0.0
    %1160 = vmatmul.mubr.f32.gmra.mrb[0].mxu0 %v1060
    %v1161 = vpop.f32.mrb[0].mxu0
    %v1162 = vadd.f32 0.0, %v1161
    %v1163 = vpop.f32.mrb[0].mxu0
    %1164 = vmatprep.mubr.f32.mxu0 0.0
    %1165 = vmatmul.mubr.f32.gmra.mrb[0].mxu0 %v1063
    %v1166 = vpop.f32.mrb[0].mxu0
    %v1167 = vadd.f32 0.0, %v1166
    %v1168 = vpop.f32.mrb[0].mxu0
    %1169 = vdwg.mxu0
    %v1170 = vrcp.pop %v1019
    %v1171 = vrcp.pop %v1022
    %v1172 = vrcp.pop %v1025
    %v1173 = vrcp.pop %v1028
    %v1174 = vrcp.pop %v1031
    %v1175 = vrcp.pop %v1034
    %v1176 = vrcp.pop %v1037
    %v1177 = vrcp.pop %v1040
    %v1178 = vmul.f32 %v1132, %v1170
    %v1179 = vmul.f32 %v1137, %v1171
    %v1180 = vmul.f32 %v1142, %v1172
    %v1181 = vmul.f32 %v1147, %v1173
    %v1182 = vmul.f32 %v1152, %v1174
    %v1183 = vmul.f32 %v1157, %v1175
    %v1184 = vmul.f32 %v1162, %v1176
    %v1185 = vmul.f32 %v1167, %v1177
    %1186 = vrot.lane.b32.xlu0 %v764, 96
    %v1187 = vpop.permute.xlu0 %1186
    %1188 = vrot.lane.b32.xlu0 %v765, 96
    %v1189 = vpop.permute.xlu0 %1188
    %1190 = vrot.lane.b32.xlu0 %v766, 96
    %v1191 = vpop.permute.xlu0 %1190
    %1192 = vrot.lane.b32.xlu0 %v767, 96
    %v1193 = vpop.permute.xlu0 %1192
    %1194 = vrot.lane.b32.xlu0 %v768, 96
    %v1195 = vpop.permute.xlu0 %1194
    %1196 = vrot.lane.b32.xlu0 %v769, 96
    %v1197 = vpop.permute.xlu0 %1196
    %1198 = vrot.lane.b32.xlu0 %v770, 96
    %v1199 = vpop.permute.xlu0 %1198
    %1200 = vrot.lane.b32.xlu0 %v771, 96
    %v1201 = vpop.permute.xlu0 %1200
    %1202 = vrot.lane.b32.xlu0 %v764, 32
    %v1203 = vpop.permute.xlu0 %1202
    %1204 = vrot.lane.b32.xlu0 %v765, 32
    %v1205 = vpop.permute.xlu0 %1204
    %1206 = vrot.lane.b32.xlu0 %v766, 32
    %v1207 = vpop.permute.xlu0 %1206
    %1208 = vrot.lane.b32.xlu0 %v767, 32
    %v1209 = vpop.permute.xlu0 %1208
    %1210 = vrot.lane.b32.xlu0 %v768, 32
    %v1211 = vpop.permute.xlu0 %1210
    %1212 = vrot.lane.b32.xlu0 %v769, 32
    %v1213 = vpop.permute.xlu0 %1212
    %1214 = vrot.lane.b32.xlu0 %v770, 32
    %v1215 = vpop.permute.xlu0 %1214
    %1216 = vrot.lane.b32.xlu0 %v771, 32
    %v1217 = vpop.permute.xlu0 %1216
    %v1218 = vsel %vm831, %v1187, 0
    %v1220 = vsel %vm831, %v1189, 0
    %v1222 = vsel %vm831, %v1191, 0
    %v1224 = vsel %vm831, %v1193, 0
    %v1226 = vsel %vm831, %v1195, 0
    %v1228 = vsel %vm831, %v1197, 0
    %v1230 = vsel %vm831, %v1199, 0
    %v1232 = vsel %vm831, %v1201, 0
    %v1234 = vsel %vm831, %v1203, 0
    %v1236 = vsel %vm831, %v1205, 0
    %v1238 = vsel %vm831, %v1207, 0
    %v1240 = vsel %vm831, %v1209, 0
    %v1242 = vsel %vm831, %v1211, 0
    %v1244 = vsel %vm831, %v1213, 0
    %v1246 = vsel %vm831, %v1215, 0
    %v1248 = vsel %vm831, %v1217, 0
    %1250 = vmatprep.subr.mxu0 0.0
    %1251 = vmatpush1.xpose.msra.mxu0 %v1234
    %1252 = vmatprep.subr.mxu0 0.0
    %1253 = vmatpush1.xpose.msra.mxu0 %v1236
    %1254 = vmatprep.subr.mxu0 0.0
    %1255 = vmatpush1.xpose.msra.mxu0 %v1238
    %1256 = vmatprep.subr.mxu0 0.0
    %1257 = vmatpush1.xpose.msra.mxu0 %v1240
    %1258 = vmatprep.subr.mxu0 0.0
    %1259 = vmatpush1.xpose.msra.mxu0 %v1242
    %1260 = vmatprep.subr.mxu0 0.0
    %1261 = vmatpush1.xpose.msra.mxu0 %v1244
    %1262 = vmatprep.subr.mxu0 0.0
    %1263 = vmatpush1.xpose.msra.mxu0 %v1246
    %1264 = vmatprep.subr.mxu0 0.0
    %1265 = vmatpush1.xpose.msra.mxu0 %v1248
    %1266 = vmatprep.subr.mxu0 0.0
    %1267 = vmatpush1.xpose.msra.mxu0 0.0
    %1268 = vmatprep.subr.mxu0 0.0
    %1269 = vmatpush1.xpose.msra.mxu0 0.0
    %1270 = vmatprep.subr.mxu0 0.0
    %1271 = vmatpush1.xpose.msra.mxu0 0.0
    %1272 = vmatprep.subr.mxu0 0.0
    %1273 = vmatpush1.xpose.msra.mxu0 0.0
    %1274 = vmatprep.subr.mxu0 0.0
    %1275 = vmatpush1.xpose.msra.mxu0 0.0
    %1276 = vmatprep.subr.mxu0 0.0
    %1277 = vmatpush1.xpose.msra.mxu0 0.0
    %1278 = vmatprep.subr.mxu0 0.0
    %1279 = vmatpush1.xpose.msra.mxu0 0.0
    %1280 = vmatprep.subr.mxu0 0.0
    %1281 = vmatpush1.xpose.msra.mxu0 0.0
    %1282 = vmatprep.subr.mxu0 0.0
    %1283 = vmatpush1.xpose.msra.mxu0 0.0
    %1284 = vmatprep.subr.mxu0 0.0
    %1285 = vmatpush1.xpose.msra.mxu0 0.0
    %1286 = vmatprep.subr.mxu0 0.0
    %1287 = vmatpush1.xpose.msra.mxu0 0.0
    %1288 = vmatprep.subr.mxu0 0.0
    %1289 = vmatpush1.xpose.msra.mxu0 0.0
    %1290 = vmatprep.subr.mxu0 0.0
    %1291 = vmatpush1.xpose.msra.mxu0 0.0
    %1292 = vmatprep.subr.mxu0 0.0
    %1293 = vmatpush1.xpose.msra.mxu0 0.0
    %1294 = vmatprep.subr.mxu0 0.0
    %1295 = vmatpush1.xpose.msra.mxu0 0.0
    %1296 = vmatprep.subr.mxu0 0.0
    %1297 = vmatpush1.xpose.msra.mxu0 0.0
    %1298 = vmatprep.subr.mxu0 0.0
    %1299 = vmatpush1.xpose.msra.mxu0 0.0
    %1300 = vmatprep.subr.mxu0 0.0
    %1301 = vmatpush1.xpose.msra.mxu0 0.0
    %1302 = vmatprep.subr.mxu0 0.0
    %1303 = vmatpush1.xpose.msra.mxu0 0.0
    %1304 = vmatprep.subr.mxu0 0.0
    %1305 = vmatpush1.xpose.msra.mxu0 0.0
    %1306 = vmatprep.subr.mxu0 0.0
    %1307 = vmatpush1.xpose.msra.mxu0 0.0
    %1308 = vmatprep.subr.mxu0 0.0
    %1309 = vmatpush1.xpose.msra.mxu0 0.0
    %1310 = vmatprep.subr.mxu0 0.0
    %1311 = vmatpush1.xpose.msra.mxu0 0.0
    %1312 = vmatprep.subr.mxu0 0.0
    %1313 = vmatpush1.xpose.msra.mxu0 0.0
    %1314 = vmatprep.mubr.f32.mxu0 0.0
    %1315 = vmatmul.mubr.f32.gmra.mrb[0].mxu0 %v1218
    %v1316 = vpop.f32.mrb[0].mxu0
    %v1317 = vadd.f32 %v799, %v1316
    %v1318 = vpop.f32.mrb[0].mxu0
    %1319 = vmatprep.mubr.f32.mxu0 0.0
    %1320 = vmatmul.mubr.f32.gmra.mrb[0].mxu0 %v1220
    %v1321 = vpop.f32.mrb[0].mxu0
    %v1322 = vadd.f32 %v800, %v1321
    %v1323 = vpop.f32.mrb[0].mxu0
    %1324 = vmatprep.mubr.f32.mxu0 0.0
    %1325 = vmatmul.mubr.f32.gmra.mrb[0].mxu0 %v1222
    %v1326 = vpop.f32.mrb[0].mxu0
    %v1327 = vadd.f32 %v801, %v1326
    %v1328 = vpop.f32.mrb[0].mxu0
    %1329 = vmatprep.mubr.f32.mxu0 0.0
    %1330 = vmatmul.mubr.f32.gmra.mrb[0].mxu0 %v1224
    %v1331 = vpop.f32.mrb[0].mxu0
    %v1332 = vadd.f32 %v802, %v1331
    %v1333 = vpop.f32.mrb[0].mxu0
    %1334 = vmatprep.mubr.f32.mxu0 0.0
    %1335 = vmatmul.mubr.f32.gmra.mrb[0].mxu0 %v1226
    %v1336 = vpop.f32.mrb[0].mxu0
    %v1337 = vadd.f32 %v803, %v1336
    %v1338 = vpop.f32.mrb[0].mxu0
    %1339 = vmatprep.mubr.f32.mxu0 0.0
    %1340 = vmatmul.mubr.f32.gmra.mrb[0].mxu0 %v1228
    %v1341 = vpop.f32.mrb[0].mxu0
    %v1342 = vadd.f32 %v804, %v1341
    %v1343 = vpop.f32.mrb[0].mxu0
    %1344 = vmatprep.mubr.f32.mxu0 0.0
    %1345 = vmatmul.mubr.f32.gmra.mrb[0].mxu0 %v1230
    %v1346 = vpop.f32.mrb[0].mxu0
    %v1347 = vadd.f32 %v805, %v1346
    %v1348 = vpop.f32.mrb[0].mxu0
    %1349 = vmatprep.mubr.f32.mxu0 0.0
    %1350 = vmatmul.mubr.f32.gmra.mrb[0].mxu0 %v1232
    %v1351 = vpop.f32.mrb[0].mxu0
    %v1352 = vadd.f32 %v806, %v1351
    %v1353 = vpop.f32.mrb[0].mxu0
    %1354 = vdwg.mxu0
    %v1355 = vsel %vm49, %v1317, -inf
    %1356 = vmax.xlane.f32.xlu0 %v1355
    %v1357 = vpop.xlane.xlu0 %1356
    %v1358 = vsel %vm49, %v1322, -inf
    %1359 = vmax.xlane.f32.xlu0 %v1358
    %v1360 = vpop.xlane.xlu0 %1359
    %v1361 = vsel %vm49, %v1327, -inf
    %1362 = vmax.xlane.f32.xlu0 %v1361
    %v1363 = vpop.xlane.xlu0 %1362
    %v1364 = vsel %vm49, %v1332, -inf
    %1365 = vmax.xlane.f32.xlu0 %v1364
    %v1366 = vpop.xlane.xlu0 %1365
    %v1367 = vsel %vm49, %v1337, -inf
    %1368 = vmax.xlane.f32.xlu0 %v1367
    %v1369 = vpop.xlane.xlu0 %1368
    %v1370 = vsel %vm49, %v1342, -inf
    %1371 = vmax.xlane.f32.xlu0 %v1370
    %v1372 = vpop.xlane.xlu0 %1371
    %v1373 = vsel %vm49, %v1347, -inf
    %1374 = vmax.xlane.f32.xlu0 %v1373
    %v1375 = vpop.xlane.xlu0 %1374
    %v1376 = vsel %vm49, %v1352, -inf
    %1377 = vmax.xlane.f32.xlu0 %v1376
    %v1378 = vpop.xlane.xlu0 %1377
    %v1379 = vsub.f32 %v1317, %v1357
    %v1380 = vsub.f32 %v1322, %v1360
    %v1381 = vsub.f32 %v1327, %v1363
    %v1382 = vsub.f32 %v1332, %v1366
    %v1383 = vsub.f32 %v1337, %v1369
    %v1384 = vsub.f32 %v1342, %v1372
    %v1385 = vsub.f32 %v1347, %v1375
    %v1386 = vsub.f32 %v1352, %v1378
    %v1387 = vmul.f32 %v1379, 1.442695
    %v1388 = vpow.pop %v1387
    %v1389 = vmul.f32 %v1380, 1.442695
    %v1390 = vpow.pop %v1389
    %v1391 = vmul.f32 %v1381, 1.442695
    %v1392 = vpow.pop %v1391
    %v1393 = vmul.f32 %v1382, 1.442695
    %v1394 = vpow.pop %v1393
    %v1395 = vmul.f32 %v1383, 1.442695
    %v1396 = vpow.pop %v1395
    %v1397 = vmul.f32 %v1384, 1.442695
    %v1398 = vpow.pop %v1397
    %v1399 = vmul.f32 %v1385, 1.442695
    %v1400 = vpow.pop %v1399
    %v1401 = vmul.f32 %v1386, 1.442695
    %v1402 = vpow.pop %v1401
    %v1403 = vsel %vm49, %v1388, 0.0
    %1404 = vadd.xlane.f32.xlu0 %v1403
    %v1405 = vpop.xlane.xlu0 %1404
    %v1406 = vsel %vm49, %v1390, 0.0
    %1407 = vadd.xlane.f32.xlu0 %v1406
    %v1408 = vpop.xlane.xlu0 %1407
    %v1409 = vsel %vm49, %v1392, 0.0
    %1410 = vadd.xlane.f32.xlu0 %v1409
    %v1411 = vpop.xlane.xlu0 %1410
    %v1412 = vsel %vm49, %v1394, 0.0
    %1413 = vadd.xlane.f32.xlu0 %v1412
    %v1414 = vpop.xlane.xlu0 %1413
    %v1415 = vsel %vm49, %v1396, 0.0
    %1416 = vadd.xlane.f32.xlu0 %v1415
    %v1417 = vpop.xlane.xlu0 %1416
    %v1418 = vsel %vm49, %v1398, 0.0
    %1419 = vadd.xlane.f32.xlu0 %v1418
    %v1420 = vpop.xlane.xlu0 %1419
    %v1421 = vsel %vm49, %v1400, 0.0
    %1422 = vadd.xlane.f32.xlu0 %v1421
    %v1423 = vpop.xlane.xlu0 %1422
    %v1424 = vsel %vm49, %v1402, 0.0
    %1425 = vadd.xlane.f32.xlu0 %v1424
    %v1426 = vpop.xlane.xlu0 %1425
    %1435 = vrot.lane.b32.xlu0 %v622, 96
    %v1436 = vpop.permute.xlu0 %1435
    %1437 = vrot.lane.b32.xlu0 %v627, 96
    %v1438 = vpop.permute.xlu0 %1437
    %1439 = vrot.lane.b32.xlu0 %v632, 96
    %v1440 = vpop.permute.xlu0 %1439
    %1441 = vrot.lane.b32.xlu0 %v637, 96
    %v1442 = vpop.permute.xlu0 %1441
    %1443 = vrot.lane.b32.xlu0 %v642, 96
    %v1444 = vpop.permute.xlu0 %1443
    %1445 = vrot.lane.b32.xlu0 %v647, 96
    %v1446 = vpop.permute.xlu0 %1445
    %1447 = vrot.lane.b32.xlu0 %v652, 96
    %v1448 = vpop.permute.xlu0 %1447
    %1449 = vrot.lane.b32.xlu0 %v657, 96
    %v1450 = vpop.permute.xlu0 %1449
    %v1460 = vsel %vm49, %v1388, 0
    %v1463 = vsel %vm49, %v1390, 0
    %v1466 = vsel %vm49, %v1392, 0
    %v1469 = vsel %vm49, %v1394, 0
    %v1472 = vsel %vm49, %v1396, 0
    %v1475 = vsel %vm49, %v1398, 0
    %v1478 = vsel %vm49, %v1400, 0
    %v1481 = vsel %vm49, %v1402, 0
    %1483 = vmatprep.subr.mxu0 0.0
    %1484 = vmatpush1.msra.mxu0 %v1436
    %1485 = vmatprep.subr.mxu0 0.0
    %1486 = vmatpush1.msra.mxu0 %v1438
    %1487 = vmatprep.subr.mxu0 0.0
    %1488 = vmatpush1.msra.mxu0 %v1440
    %1489 = vmatprep.subr.mxu0 0.0
    %1490 = vmatpush1.msra.mxu0 %v1442
    %1491 = vmatprep.subr.mxu0 0.0
    %1492 = vmatpush1.msra.mxu0 %v1444
    %1493 = vmatprep.subr.mxu0 0.0
    %1494 = vmatpush1.msra.mxu0 %v1446
    %1495 = vmatprep.subr.mxu0 0.0
    %1496 = vmatpush1.msra.mxu0 %v1448
    %1497 = vmatprep.subr.mxu0 0.0
    %1498 = vmatpush1.msra.mxu0 %v1450
    %1499 = vmatprep.subr.mxu0 0.0
    %1500 = vmatpush1.msra.mxu0 0.0
    %1501 = vmatprep.subr.mxu0 0.0
    %1502 = vmatpush1.msra.mxu0 0.0
    %1503 = vmatprep.subr.mxu0 0.0
    %1504 = vmatpush1.msra.mxu0 0.0
    %1505 = vmatprep.subr.mxu0 0.0
    %1506 = vmatpush1.msra.mxu0 0.0
    %1507 = vmatprep.subr.mxu0 0.0
    %1508 = vmatpush1.msra.mxu0 0.0
    %1509 = vmatprep.subr.mxu0 0.0
    %1510 = vmatpush1.msra.mxu0 0.0
    %1511 = vmatprep.subr.mxu0 0.0
    %1512 = vmatpush1.msra.mxu0 0.0
    %1513 = vmatprep.subr.mxu0 0.0
    %1514 = vmatpush1.msra.mxu0 0.0
    %1515 = vmatprep.subr.mxu0 0.0
    %1516 = vmatpush1.msra.mxu0 0.0
    %1517 = vmatprep.subr.mxu0 0.0
    %1518 = vmatpush1.msra.mxu0 0.0
    %1519 = vmatprep.subr.mxu0 0.0
    %1520 = vmatpush1.msra.mxu0 0.0
    %1521 = vmatprep.subr.mxu0 0.0
    %1522 = vmatpush1.msra.mxu0 0.0
    %1523 = vmatprep.subr.mxu0 0.0
    %1524 = vmatpush1.msra.mxu0 0.0
    %1525 = vmatprep.subr.mxu0 0.0
    %1526 = vmatpush1.msra.mxu0 0.0
    %1527 = vmatprep.subr.mxu0 0.0
    %1528 = vmatpush1.msra.mxu0 0.0
    %1529 = vmatprep.subr.mxu0 0.0
    %1530 = vmatpush1.msra.mxu0 0.0
    %1531 = vmatprep.subr.mxu0 0.0
    %1532 = vmatpush1.msra.mxu0 0.0
    %1533 = vmatprep.subr.mxu0 0.0
    %1534 = vmatpush1.msra.mxu0 0.0
    %1535 = vmatprep.subr.mxu0 0.0
    %1536 = vmatpush1.msra.mxu0 0.0
    %1537 = vmatprep.subr.mxu0 0.0
    %1538 = vmatpush1.msra.mxu0 0.0
    %1539 = vmatprep.subr.mxu0 0.0
    %1540 = vmatpush1.msra.mxu0 0.0
    %1541 = vmatprep.subr.mxu0 0.0
    %1542 = vmatpush1.msra.mxu0 0.0
    %1543 = vmatprep.subr.mxu0 0.0
    %1544 = vmatpush1.msra.mxu0 0.0
    %1545 = vmatprep.subr.mxu0 0.0
    %1546 = vmatpush1.msra.mxu0 0.0
    %1547 = vmatprep.mubr.f32.mxu0 0.0
    %1548 = vmatmul.mubr.f32.gmra.mrb[0].mxu0 %v1460
    %v1549 = vpop.f32.mrb[0].mxu0
    %v1550 = vadd.f32 0.0, %v1549
    %v1551 = vpop.f32.mrb[0].mxu0
    %1552 = vmatprep.mubr.f32.mxu0 0.0
    %1553 = vmatmul.mubr.f32.gmra.mrb[0].mxu0 %v1463
    %v1554 = vpop.f32.mrb[0].mxu0
    %v1555 = vadd.f32 0.0, %v1554
    %v1556 = vpop.f32.mrb[0].mxu0
    %1557 = vmatprep.mubr.f32.mxu0 0.0
    %1558 = vmatmul.mubr.f32.gmra.mrb[0].mxu0 %v1466
    %v1559 = vpop.f32.mrb[0].mxu0
    %v1560 = vadd.f32 0.0, %v1559
    %v1561 = vpop.f32.mrb[0].mxu0
    %1562 = vmatprep.mubr.f32.mxu0 0.0
    %1563 = vmatmul.mubr.f32.gmra.mrb[0].mxu0 %v1469
    %v1564 = vpop.f32.mrb[0].mxu0
    %v1565 = vadd.f32 0.0, %v1564
    %v1566 = vpop.f32.mrb[0].mxu0
    %1567 = vmatprep.mubr.f32.mxu0 0.0
    %1568 = vmatmul.mubr.f32.gmra.mrb[0].mxu0 %v1472
    %v1569 = vpop.f32.mrb[0].mxu0
    %v1570 = vadd.f32 0.0, %v1569
    %v1571 = vpop.f32.mrb[0].mxu0
    %1572 = vmatprep.mubr.f32.mxu0 0.0
    %1573 = vmatmul.mubr.f32.gmra.mrb[0].mxu0 %v1475
    %v1574 = vpop.f32.mrb[0].mxu0
    %v1575 = vadd.f32 0.0, %v1574
    %v1576 = vpop.f32.mrb[0].mxu0
    %1577 = vmatprep.mubr.f32.mxu0 0.0
    %1578 = vmatmul.mubr.f32.gmra.mrb[0].mxu0 %v1478
    %v1579 = vpop.f32.mrb[0].mxu0
    %v1580 = vadd.f32 0.0, %v1579
    %v1581 = vpop.f32.mrb[0].mxu0
    %1582 = vmatprep.mubr.f32.mxu0 0.0
    %1583 = vmatmul.mubr.f32.gmra.mrb[0].mxu0 %v1481
    %v1584 = vpop.f32.mrb[0].mxu0
    %v1585 = vadd.f32 0.0, %v1584
    %v1586 = vpop.f32.mrb[0].mxu0
    %1587 = vdwg.mxu0
    %v1588 = vrcp.pop %v1405
    %v1589 = vrcp.pop %v1408
    %v1590 = vrcp.pop %v1411
    %v1591 = vrcp.pop %v1414
    %v1592 = vrcp.pop %v1417
    %v1593 = vrcp.pop %v1420
    %v1594 = vrcp.pop %v1423
    %v1595 = vrcp.pop %v1426
    %v1596 = vmul.f32 %v1550, %v1588
    %v1597 = vmul.f32 %v1555, %v1589
    %v1598 = vmul.f32 %v1560, %v1590
    %v1599 = vmul.f32 %v1565, %v1591
    %v1600 = vmul.f32 %v1570, %v1592
    %v1601 = vmul.f32 %v1575, %v1593
    %v1602 = vmul.f32 %v1580, %v1594
    %v1603 = vmul.f32 %v1585, %v1595
    %1612 = vrot.lane.b32.xlu0 %v1596, 32
    %v1613 = vpop.permute.xlu0 %1612
    %1614 = vrot.lane.b32.xlu0 %v1597, 32
    %v1615 = vpop.permute.xlu0 %1614
    %1616 = vrot.lane.b32.xlu0 %v1598, 32
    %v1617 = vpop.permute.xlu0 %1616
    %1618 = vrot.lane.b32.xlu0 %v1599, 32
    %v1619 = vpop.permute.xlu0 %1618
    %1620 = vrot.lane.b32.xlu0 %v1600, 32
    %v1621 = vpop.permute.xlu0 %1620
    %1622 = vrot.lane.b32.xlu0 %v1601, 32
    %v1623 = vpop.permute.xlu0 %1622
    %1624 = vrot.lane.b32.xlu0 %v1602, 32
    %v1625 = vpop.permute.xlu0 %1624
    %1626 = vrot.lane.b32.xlu0 %v1603, 32
    %v1627 = vpop.permute.xlu0 %1626
    %v1636 = vsel %vm831, %v1178, %v1613
    %v1637 = vsel %vm831, %v1179, %v1615
    %v1638 = vsel %vm831, %v1180, %v1617
    %v1639 = vsel %vm831, %v1181, %v1619
    %v1640 = vsel %vm831, %v1182, %v1621
    %v1641 = vsel %vm831, %v1183, %v1623
    %v1642 = vsel %vm831, %v1184, %v1625
    %v1643 = vsel %vm831, %v1185, %v1627
    %1652 = vrot.lane.b32.xlu0 %v772, 64
    %v1653 = vpop.permute.xlu0 %1652
    %1654 = vrot.lane.b32.xlu0 %v773, 64
    %v1655 = vpop.permute.xlu0 %1654
    %1656 = vrot.lane.b32.xlu0 %v774, 64
    %v1657 = vpop.permute.xlu0 %1656
    %1658 = vrot.lane.b32.xlu0 %v775, 64
    %v1659 = vpop.permute.xlu0 %1658
    %1660 = vrot.lane.b32.xlu0 %v776, 64
    %v1661 = vpop.permute.xlu0 %1660
    %1662 = vrot.lane.b32.xlu0 %v777, 64
    %v1663 = vpop.permute.xlu0 %1662
    %1664 = vrot.lane.b32.xlu0 %v778, 64
    %v1665 = vpop.permute.xlu0 %1664
    %1666 = vrot.lane.b32.xlu0 %v779, 64
    %v1667 = vpop.permute.xlu0 %1666
    %v1668 = vsel %vm831, %v772, 0
    %v1670 = vsel %vm831, %v773, 0
    %v1672 = vsel %vm831, %v774, 0
    %v1674 = vsel %vm831, %v775, 0
    %v1676 = vsel %vm831, %v776, 0
    %v1678 = vsel %vm831, %v777, 0
    %v1680 = vsel %vm831, %v778, 0
    %v1682 = vsel %vm831, %v779, 0
    %v1684 = vsel %vm831, %v1653, 0
    %v1686 = vsel %vm831, %v1655, 0
    %v1688 = vsel %vm831, %v1657, 0
    %v1690 = vsel %vm831, %v1659, 0
    %v1692 = vsel %vm831, %v1661, 0
    %v1694 = vsel %vm831, %v1663, 0
    %v1696 = vsel %vm831, %v1665, 0
    %v1698 = vsel %vm831, %v1667, 0
    %1700 = vmatprep.subr.mxu0 0.0
    %1701 = vmatpush1.xpose.msra.mxu0 %v1684
    %1702 = vmatprep.subr.mxu0 0.0
    %1703 = vmatpush1.xpose.msra.mxu0 %v1686
    %1704 = vmatprep.subr.mxu0 0.0
    %1705 = vmatpush1.xpose.msra.mxu0 %v1688
    %1706 = vmatprep.subr.mxu0 0.0
    %1707 = vmatpush1.xpose.msra.mxu0 %v1690
    %1708 = vmatprep.subr.mxu0 0.0
    %1709 = vmatpush1.xpose.msra.mxu0 %v1692
    %1710 = vmatprep.subr.mxu0 0.0
    %1711 = vmatpush1.xpose.msra.mxu0 %v1694
    %1712 = vmatprep.subr.mxu0 0.0
    %1713 = vmatpush1.xpose.msra.mxu0 %v1696
    %1714 = vmatprep.subr.mxu0 0.0
    %1715 = vmatpush1.xpose.msra.mxu0 %v1698
    %1716 = vmatprep.subr.mxu0 0.0
    %1717 = vmatpush1.xpose.msra.mxu0 0.0
    %1718 = vmatprep.subr.mxu0 0.0
    %1719 = vmatpush1.xpose.msra.mxu0 0.0
    %1720 = vmatprep.subr.mxu0 0.0
    %1721 = vmatpush1.xpose.msra.mxu0 0.0
    %1722 = vmatprep.subr.mxu0 0.0
    %1723 = vmatpush1.xpose.msra.mxu0 0.0
    %1724 = vmatprep.subr.mxu0 0.0
    %1725 = vmatpush1.xpose.msra.mxu0 0.0
    %1726 = vmatprep.subr.mxu0 0.0
    %1727 = vmatpush1.xpose.msra.mxu0 0.0
    %1728 = vmatprep.subr.mxu0 0.0
    %1729 = vmatpush1.xpose.msra.mxu0 0.0
    %1730 = vmatprep.subr.mxu0 0.0
    %1731 = vmatpush1.xpose.msra.mxu0 0.0
    %1732 = vmatprep.subr.mxu0 0.0
    %1733 = vmatpush1.xpose.msra.mxu0 0.0
    %1734 = vmatprep.subr.mxu0 0.0
    %1735 = vmatpush1.xpose.msra.mxu0 0.0
    %1736 = vmatprep.subr.mxu0 0.0
    %1737 = vmatpush1.xpose.msra.mxu0 0.0
    %1738 = vmatprep.subr.mxu0 0.0
    %1739 = vmatpush1.xpose.msra.mxu0 0.0
    %1740 = vmatprep.subr.mxu0 0.0
    %1741 = vmatpush1.xpose.msra.mxu0 0.0
    %1742 = vmatprep.subr.mxu0 0.0
    %1743 = vmatpush1.xpose.msra.mxu0 0.0
    %1744 = vmatprep.subr.mxu0 0.0
    %1745 = vmatpush1.xpose.msra.mxu0 0.0
    %1746 = vmatprep.subr.mxu0 0.0
    %1747 = vmatpush1.xpose.msra.mxu0 0.0
    %1748 = vmatprep.subr.mxu0 0.0
    %1749 = vmatpush1.xpose.msra.mxu0 0.0
    %1750 = vmatprep.subr.mxu0 0.0
    %1751 = vmatpush1.xpose.msra.mxu0 0.0
    %1752 = vmatprep.subr.mxu0 0.0
    %1753 = vmatpush1.xpose.msra.mxu0 0.0
    %1754 = vmatprep.subr.mxu0 0.0
    %1755 = vmatpush1.xpose.msra.mxu0 0.0
    %1756 = vmatprep.subr.mxu0 0.0
    %1757 = vmatpush1.xpose.msra.mxu0 0.0
    %1758 = vmatprep.subr.mxu0 0.0
    %1759 = vmatpush1.xpose.msra.mxu0 0.0
    %1760 = vmatprep.subr.mxu0 0.0
    %1761 = vmatpush1.xpose.msra.mxu0 0.0
    %1762 = vmatprep.subr.mxu0 0.0
    %1763 = vmatpush1.xpose.msra.mxu0 0.0
    %1764 = vmatprep.mubr.f32.mxu0 0.0
    %1765 = vmatmul.mubr.f32.gmra.mrb[0].mxu0 %v1668
    %v1766 = vpop.f32.mrb[0].mxu0
    %v1767 = vadd.f32 %v799, %v1766
    %v1768 = vpop.f32.mrb[0].mxu0
    %1769 = vmatprep.mubr.f32.mxu0 0.0
    %1770 = vmatmul.mubr.f32.gmra.mrb[0].mxu0 %v1670
    %v1771 = vpop.f32.mrb[0].mxu0
    %v1772 = vadd.f32 %v800, %v1771
    %v1773 = vpop.f32.mrb[0].mxu0
    %1774 = vmatprep.mubr.f32.mxu0 0.0
    %1775 = vmatmul.mubr.f32.gmra.mrb[0].mxu0 %v1672
    %v1776 = vpop.f32.mrb[0].mxu0
    %v1777 = vadd.f32 %v801, %v1776
    %v1778 = vpop.f32.mrb[0].mxu0
    %1779 = vmatprep.mubr.f32.mxu0 0.0
    %1780 = vmatmul.mubr.f32.gmra.mrb[0].mxu0 %v1674
    %v1781 = vpop.f32.mrb[0].mxu0
    %v1782 = vadd.f32 %v802, %v1781
    %v1783 = vpop.f32.mrb[0].mxu0
    %1784 = vmatprep.mubr.f32.mxu0 0.0
    %1785 = vmatmul.mubr.f32.gmra.mrb[0].mxu0 %v1676
    %v1786 = vpop.f32.mrb[0].mxu0
    %v1787 = vadd.f32 %v803, %v1786
    %v1788 = vpop.f32.mrb[0].mxu0
    %1789 = vmatprep.mubr.f32.mxu0 0.0
    %1790 = vmatmul.mubr.f32.gmra.mrb[0].mxu0 %v1678
    %v1791 = vpop.f32.mrb[0].mxu0
    %v1792 = vadd.f32 %v804, %v1791
    %v1793 = vpop.f32.mrb[0].mxu0
    %1794 = vmatprep.mubr.f32.mxu0 0.0
    %1795 = vmatmul.mubr.f32.gmra.mrb[0].mxu0 %v1680
    %v1796 = vpop.f32.mrb[0].mxu0
    %v1797 = vadd.f32 %v805, %v1796
    %v1798 = vpop.f32.mrb[0].mxu0
    %1799 = vmatprep.mubr.f32.mxu0 0.0
    %1800 = vmatmul.mubr.f32.gmra.mrb[0].mxu0 %v1682
    %v1801 = vpop.f32.mrb[0].mxu0
    %v1802 = vadd.f32 %v806, %v1801
    %v1803 = vpop.f32.mrb[0].mxu0
    %1804 = vdwg.mxu0
    %v1805 = vsel %vm49, %v1767, -inf
    %1806 = vmax.xlane.f32.xlu0 %v1805
    %v1807 = vpop.xlane.xlu0 %1806
    %v1808 = vsel %vm49, %v1772, -inf
    %1809 = vmax.xlane.f32.xlu0 %v1808
    %v1810 = vpop.xlane.xlu0 %1809
    %v1811 = vsel %vm49, %v1777, -inf
    %1812 = vmax.xlane.f32.xlu0 %v1811
    %v1813 = vpop.xlane.xlu0 %1812
    %v1814 = vsel %vm49, %v1782, -inf
    %1815 = vmax.xlane.f32.xlu0 %v1814
    %v1816 = vpop.xlane.xlu0 %1815
    %v1817 = vsel %vm49, %v1787, -inf
    %1818 = vmax.xlane.f32.xlu0 %v1817
    %v1819 = vpop.xlane.xlu0 %1818
    %v1820 = vsel %vm49, %v1792, -inf
    %1821 = vmax.xlane.f32.xlu0 %v1820
    %v1822 = vpop.xlane.xlu0 %1821
    %v1823 = vsel %vm49, %v1797, -inf
    %1824 = vmax.xlane.f32.xlu0 %v1823
    %v1825 = vpop.xlane.xlu0 %1824
    %v1826 = vsel %vm49, %v1802, -inf
    %1827 = vmax.xlane.f32.xlu0 %v1826
    %v1828 = vpop.xlane.xlu0 %1827
    %v1829 = vsub.f32 %v1767, %v1807
    %v1830 = vsub.f32 %v1772, %v1810
    %v1831 = vsub.f32 %v1777, %v1813
    %v1832 = vsub.f32 %v1782, %v1816
    %v1833 = vsub.f32 %v1787, %v1819
    %v1834 = vsub.f32 %v1792, %v1822
    %v1835 = vsub.f32 %v1797, %v1825
    %v1836 = vsub.f32 %v1802, %v1828
    %v1837 = vmul.f32 %v1829, 1.442695
    %v1838 = vpow.pop %v1837
    %v1839 = vmul.f32 %v1830, 1.442695
    %v1840 = vpow.pop %v1839
    %v1841 = vmul.f32 %v1831, 1.442695
    %v1842 = vpow.pop %v1841
    %v1843 = vmul.f32 %v1832, 1.442695
    %v1844 = vpow.pop %v1843
    %v1845 = vmul.f32 %v1833, 1.442695
    %v1846 = vpow.pop %v1845
    %v1847 = vmul.f32 %v1834, 1.442695
    %v1848 = vpow.pop %v1847
    %v1849 = vmul.f32 %v1835, 1.442695
    %v1850 = vpow.pop %v1849
    %v1851 = vmul.f32 %v1836, 1.442695
    %v1852 = vpow.pop %v1851
    %v1853 = vsel %vm49, %v1838, 0.0
    %1854 = vadd.xlane.f32.xlu0 %v1853
    %v1855 = vpop.xlane.xlu0 %1854
    %v1856 = vsel %vm49, %v1840, 0.0
    %1857 = vadd.xlane.f32.xlu0 %v1856
    %v1858 = vpop.xlane.xlu0 %1857
    %v1859 = vsel %vm49, %v1842, 0.0
    %1860 = vadd.xlane.f32.xlu0 %v1859
    %v1861 = vpop.xlane.xlu0 %1860
    %v1862 = vsel %vm49, %v1844, 0.0
    %1863 = vadd.xlane.f32.xlu0 %v1862
    %v1864 = vpop.xlane.xlu0 %1863
    %v1865 = vsel %vm49, %v1846, 0.0
    %1866 = vadd.xlane.f32.xlu0 %v1865
    %v1867 = vpop.xlane.xlu0 %1866
    %v1868 = vsel %vm49, %v1848, 0.0
    %1869 = vadd.xlane.f32.xlu0 %v1868
    %v1870 = vpop.xlane.xlu0 %1869
    %v1871 = vsel %vm49, %v1850, 0.0
    %1872 = vadd.xlane.f32.xlu0 %v1871
    %v1873 = vpop.xlane.xlu0 %1872
    %v1874 = vsel %vm49, %v1852, 0.0
    %1875 = vadd.xlane.f32.xlu0 %v1874
    %v1876 = vpop.xlane.xlu0 %1875
    %v1878 = vsel %vm49, %v1838, 0
    %v1881 = vsel %vm49, %v1840, 0
    %v1884 = vsel %vm49, %v1842, 0
    %v1887 = vsel %vm49, %v1844, 0
    %v1890 = vsel %vm49, %v1846, 0
    %v1893 = vsel %vm49, %v1848, 0
    %v1896 = vsel %vm49, %v1850, 0
    %v1899 = vsel %vm49, %v1852, 0
    %1901 = vmatprep.subr.mxu0 0.0
    %1902 = vmatpush1.msra.mxu0 %v662
    %1903 = vmatprep.subr.mxu0 0.0
    %1904 = vmatpush1.msra.mxu0 %v667
    %1905 = vmatprep.subr.mxu0 0.0
    %1906 = vmatpush1.msra.mxu0 %v672
    %1907 = vmatprep.subr.mxu0 0.0
    %1908 = vmatpush1.msra.mxu0 %v677
    %1909 = vmatprep.subr.mxu0 0.0
    %1910 = vmatpush1.msra.mxu0 %v682
    %1911 = vmatprep.subr.mxu0 0.0
    %1912 = vmatpush1.msra.mxu0 %v687
    %1913 = vmatprep.subr.mxu0 0.0
    %1914 = vmatpush1.msra.mxu0 %v692
    %1915 = vmatprep.subr.mxu0 0.0
    %1916 = vmatpush1.msra.mxu0 %v697
    %1917 = vmatprep.subr.mxu0 0.0
    %1918 = vmatpush1.msra.mxu0 0.0
    %1919 = vmatprep.subr.mxu0 0.0
    %1920 = vmatpush1.msra.mxu0 0.0
    %1921 = vmatprep.subr.mxu0 0.0
    %1922 = vmatpush1.msra.mxu0 0.0
    %1923 = vmatprep.subr.mxu0 0.0
    %1924 = vmatpush1.msra.mxu0 0.0
    %1925 = vmatprep.subr.mxu0 0.0
    %1926 = vmatpush1.msra.mxu0 0.0
    %1927 = vmatprep.subr.mxu0 0.0
    %1928 = vmatpush1.msra.mxu0 0.0
    %1929 = vmatprep.subr.mxu0 0.0
    %1930 = vmatpush1.msra.mxu0 0.0
    %1931 = vmatprep.subr.mxu0 0.0
    %1932 = vmatpush1.msra.mxu0 0.0
    %1933 = vmatprep.subr.mxu0 0.0
    %1934 = vmatpush1.msra.mxu0 0.0
    %1935 = vmatprep.subr.mxu0 0.0
    %1936 = vmatpush1.msra.mxu0 0.0
    %1937 = vmatprep.subr.mxu0 0.0
    %1938 = vmatpush1.msra.mxu0 0.0
    %1939 = vmatprep.subr.mxu0 0.0
    %1940 = vmatpush1.msra.mxu0 0.0
    %1941 = vmatprep.subr.mxu0 0.0
    %1942 = vmatpush1.msra.mxu0 0.0
    %1943 = vmatprep.subr.mxu0 0.0
    %1944 = vmatpush1.msra.mxu0 0.0
    %1945 = vmatprep.subr.mxu0 0.0
    %1946 = vmatpush1.msra.mxu0 0.0
    %1947 = vmatprep.subr.mxu0 0.0
    %1948 = vmatpush1.msra.mxu0 0.0
    %1949 = vmatprep.subr.mxu0 0.0
    %1950 = vmatpush1.msra.mxu0 0.0
    %1951 = vmatprep.subr.mxu0 0.0
    %1952 = vmatpush1.msra.mxu0 0.0
    %1953 = vmatprep.subr.mxu0 0.0
    %1954 = vmatpush1.msra.mxu0 0.0
    %1955 = vmatprep.subr.mxu0 0.0
    %1956 = vmatpush1.msra.mxu0 0.0
    %1957 = vmatprep.subr.mxu0 0.0
    %1958 = vmatpush1.msra.mxu0 0.0
    %1959 = vmatprep.subr.mxu0 0.0
    %1960 = vmatpush1.msra.mxu0 0.0
    %1961 = vmatprep.subr.mxu0 0.0
    %1962 = vmatpush1.msra.mxu0 0.0
    %1963 = vmatprep.subr.mxu0 0.0
    %1964 = vmatpush1.msra.mxu0 0.0
    %1965 = vmatprep.mubr.f32.mxu0 0.0
    %1966 = vmatmul.mubr.f32.gmra.mrb[0].mxu0 %v1878
    %v1967 = vpop.f32.mrb[0].mxu0
    %v1968 = vadd.f32 0.0, %v1967
    %v1969 = vpop.f32.mrb[0].mxu0
    %1970 = vmatprep.mubr.f32.mxu0 0.0
    %1971 = vmatmul.mubr.f32.gmra.mrb[0].mxu0 %v1881
    %v1972 = vpop.f32.mrb[0].mxu0
    %v1973 = vadd.f32 0.0, %v1972
    %v1974 = vpop.f32.mrb[0].mxu0
    %1975 = vmatprep.mubr.f32.mxu0 0.0
    %1976 = vmatmul.mubr.f32.gmra.mrb[0].mxu0 %v1884
    %v1977 = vpop.f32.mrb[0].mxu0
    %v1978 = vadd.f32 0.0, %v1977
    %v1979 = vpop.f32.mrb[0].mxu0
    %1980 = vmatprep.mubr.f32.mxu0 0.0
    %1981 = vmatmul.mubr.f32.gmra.mrb[0].mxu0 %v1887
    %v1982 = vpop.f32.mrb[0].mxu0
    %v1983 = vadd.f32 0.0, %v1982
    %v1984 = vpop.f32.mrb[0].mxu0
    %1985 = vmatprep.mubr.f32.mxu0 0.0
    %1986 = vmatmul.mubr.f32.gmra.mrb[0].mxu0 %v1890
    %v1987 = vpop.f32.mrb[0].mxu0
    %v1988 = vadd.f32 0.0, %v1987
    %v1989 = vpop.f32.mrb[0].mxu0
    %1990 = vmatprep.mubr.f32.mxu0 0.0
    %1991 = vmatmul.mubr.f32.gmra.mrb[0].mxu0 %v1893
    %v1992 = vpop.f32.mrb[0].mxu0
    %v1993 = vadd.f32 0.0, %v1992
    %v1994 = vpop.f32.mrb[0].mxu0
    %1995 = vmatprep.mubr.f32.mxu0 0.0
    %1996 = vmatmul.mubr.f32.gmra.mrb[0].mxu0 %v1896
    %v1997 = vpop.f32.mrb[0].mxu0
    %v1998 = vadd.f32 0.0, %v1997
    %v1999 = vpop.f32.mrb[0].mxu0
    %2000 = vmatprep.mubr.f32.mxu0 0.0
    %2001 = vmatmul.mubr.f32.gmra.mrb[0].mxu0 %v1899
    %v2002 = vpop.f32.mrb[0].mxu0
    %v2003 = vadd.f32 0.0, %v2002
    %v2004 = vpop.f32.mrb[0].mxu0
    %2005 = vdwg.mxu0
    %v2006 = vrcp.pop %v1855
    %v2007 = vrcp.pop %v1858
    %v2008 = vrcp.pop %v1861
    %v2009 = vrcp.pop %v1864
    %v2010 = vrcp.pop %v1867
    %v2011 = vrcp.pop %v1870
    %v2012 = vrcp.pop %v1873
    %v2013 = vrcp.pop %v1876
    %v2014 = vmul.f32 %v1968, %v2006
    %v2015 = vmul.f32 %v1973, %v2007
    %v2016 = vmul.f32 %v1978, %v2008
    %v2017 = vmul.f32 %v1983, %v2009
    %v2018 = vmul.f32 %v1988, %v2010
    %v2019 = vmul.f32 %v1993, %v2011
    %v2020 = vmul.f32 %v1998, %v2012
    %v2021 = vmul.f32 %v2003, %v2013
    %2022 = vrot.lane.b32.xlu0 %v772, 96
    %v2023 = vpop.permute.xlu0 %2022
    %2024 = vrot.lane.b32.xlu0 %v773, 96
    %v2025 = vpop.permute.xlu0 %2024
    %2026 = vrot.lane.b32.xlu0 %v774, 96
    %v2027 = vpop.permute.xlu0 %2026
    %2028 = vrot.lane.b32.xlu0 %v775, 96
    %v2029 = vpop.permute.xlu0 %2028
    %2030 = vrot.lane.b32.xlu0 %v776, 96
    %v2031 = vpop.permute.xlu0 %2030
    %2032 = vrot.lane.b32.xlu0 %v777, 96
    %v2033 = vpop.permute.xlu0 %2032
    %2034 = vrot.lane.b32.xlu0 %v778, 96
    %v2035 = vpop.permute.xlu0 %2034
    %2036 = vrot.lane.b32.xlu0 %v779, 96
    %v2037 = vpop.permute.xlu0 %2036
    %2038 = vrot.lane.b32.xlu0 %v772, 32
    %v2039 = vpop.permute.xlu0 %2038
    %2040 = vrot.lane.b32.xlu0 %v773, 32
    %v2041 = vpop.permute.xlu0 %2040
    %2042 = vrot.lane.b32.xlu0 %v774, 32
    %v2043 = vpop.permute.xlu0 %2042
    %2044 = vrot.lane.b32.xlu0 %v775, 32
    %v2045 = vpop.permute.xlu0 %2044
    %2046 = vrot.lane.b32.xlu0 %v776, 32
    %v2047 = vpop.permute.xlu0 %2046
    %2048 = vrot.lane.b32.xlu0 %v777, 32
    %v2049 = vpop.permute.xlu0 %2048
    %2050 = vrot.lane.b32.xlu0 %v778, 32
    %v2051 = vpop.permute.xlu0 %2050
    %2052 = vrot.lane.b32.xlu0 %v779, 32
    %v2053 = vpop.permute.xlu0 %2052
    %v2054 = vsel %vm831, %v2023, 0
    %v2056 = vsel %vm831, %v2025, 0
    %v2058 = vsel %vm831, %v2027, 0
    %v2060 = vsel %vm831, %v2029, 0
    %v2062 = vsel %vm831, %v2031, 0
    %v2064 = vsel %vm831, %v2033, 0
    %v2066 = vsel %vm831, %v2035, 0
    %v2068 = vsel %vm831, %v2037, 0
    %v2070 = vsel %vm831, %v2039, 0
    %v2072 = vsel %vm831, %v2041, 0
    %v2074 = vsel %vm831, %v2043, 0
    %v2076 = vsel %vm831, %v2045, 0
    %v2078 = vsel %vm831, %v2047, 0
    %v2080 = vsel %vm831, %v2049, 0
    %v2082 = vsel %vm831, %v2051, 0
    %v2084 = vsel %vm831, %v2053, 0
    %2086 = vmatprep.subr.mxu0 0.0
    %2087 = vmatpush1.xpose.msra.mxu0 %v2070
    %2088 = vmatprep.subr.mxu0 0.0
    %2089 = vmatpush1.xpose.msra.mxu0 %v2072
    %2090 = vmatprep.subr.mxu0 0.0
    %2091 = vmatpush1.xpose.msra.mxu0 %v2074
    %2092 = vmatprep.subr.mxu0 0.0
    %2093 = vmatpush1.xpose.msra.mxu0 %v2076
    %2094 = vmatprep.subr.mxu0 0.0
    %2095 = vmatpush1.xpose.msra.mxu0 %v2078
    %2096 = vmatprep.subr.mxu0 0.0
    %2097 = vmatpush1.xpose.msra.mxu0 %v2080
    %2098 = vmatprep.subr.mxu0 0.0
    %2099 = vmatpush1.xpose.msra.mxu0 %v2082
    %2100 = vmatprep.subr.mxu0 0.0
    %2101 = vmatpush1.xpose.msra.mxu0 %v2084
    %2102 = vmatprep.subr.mxu0 0.0
    %2103 = vmatpush1.xpose.msra.mxu0 0.0
    %2104 = vmatprep.subr.mxu0 0.0
    %2105 = vmatpush1.xpose.msra.mxu0 0.0
    %2106 = vmatprep.subr.mxu0 0.0
    %2107 = vmatpush1.xpose.msra.mxu0 0.0
    %2108 = vmatprep.subr.mxu0 0.0
    %2109 = vmatpush1.xpose.msra.mxu0 0.0
    %2110 = vmatprep.subr.mxu0 0.0
    %2111 = vmatpush1.xpose.msra.mxu0 0.0
    %2112 = vmatprep.subr.mxu0 0.0
    %2113 = vmatpush1.xpose.msra.mxu0 0.0
    %2114 = vmatprep.subr.mxu0 0.0
    %2115 = vmatpush1.xpose.msra.mxu0 0.0
    %2116 = vmatprep.subr.mxu0 0.0
    %2117 = vmatpush1.xpose.msra.mxu0 0.0
    %2118 = vmatprep.subr.mxu0 0.0
    %2119 = vmatpush1.xpose.msra.mxu0 0.0
    %2120 = vmatprep.subr.mxu0 0.0
    %2121 = vmatpush1.xpose.msra.mxu0 0.0
    %2122 = vmatprep.subr.mxu0 0.0
    %2123 = vmatpush1.xpose.msra.mxu0 0.0
    %2124 = vmatprep.subr.mxu0 0.0
    %2125 = vmatpush1.xpose.msra.mxu0 0.0
    %2126 = vmatprep.subr.mxu0 0.0
    %2127 = vmatpush1.xpose.msra.mxu0 0.0
    %2128 = vmatprep.subr.mxu0 0.0
    %2129 = vmatpush1.xpose.msra.mxu0 0.0
    %2130 = vmatprep.subr.mxu0 0.0
    %2131 = vmatpush1.xpose.msra.mxu0 0.0
    %2132 = vmatprep.subr.mxu0 0.0
    %2133 = vmatpush1.xpose.msra.mxu0 0.0
    %2134 = vmatprep.subr.mxu0 0.0
    %2135 = vmatpush1.xpose.msra.mxu0 0.0
    %2136 = vmatprep.subr.mxu0 0.0
    %2137 = vmatpush1.xpose.msra.mxu0 0.0
    %2138 = vmatprep.subr.mxu0 0.0
    %2139 = vmatpush1.xpose.msra.mxu0 0.0
    %2140 = vmatprep.subr.mxu0 0.0
    %2141 = vmatpush1.xpose.msra.mxu0 0.0
    %2142 = vmatprep.subr.mxu0 0.0
    %2143 = vmatpush1.xpose.msra.mxu0 0.0
    %2144 = vmatprep.subr.mxu0 0.0
    %2145 = vmatpush1.xpose.msra.mxu0 0.0
    %2146 = vmatprep.subr.mxu0 0.0
    %2147 = vmatpush1.xpose.msra.mxu0 0.0
    %2148 = vmatprep.subr.mxu0 0.0
    %2149 = vmatpush1.xpose.msra.mxu0 0.0
    %2150 = vmatprep.mubr.f32.mxu0 0.0
    %2151 = vmatmul.mubr.f32.gmra.mrb[0].mxu0 %v2054
    %v2152 = vpop.f32.mrb[0].mxu0
    %v2153 = vadd.f32 %v799, %v2152
    %v2154 = vpop.f32.mrb[0].mxu0
    %2155 = vmatprep.mubr.f32.mxu0 0.0
    %2156 = vmatmul.mubr.f32.gmra.mrb[0].mxu0 %v2056
    %v2157 = vpop.f32.mrb[0].mxu0
    %v2158 = vadd.f32 %v800, %v2157
    %v2159 = vpop.f32.mrb[0].mxu0
    %2160 = vmatprep.mubr.f32.mxu0 0.0
    %2161 = vmatmul.mubr.f32.gmra.mrb[0].mxu0 %v2058
    %v2162 = vpop.f32.mrb[0].mxu0
    %v2163 = vadd.f32 %v801, %v2162
    %v2164 = vpop.f32.mrb[0].mxu0
    %2165 = vmatprep.mubr.f32.mxu0 0.0
    %2166 = vmatmul.mubr.f32.gmra.mrb[0].mxu0 %v2060
    %v2167 = vpop.f32.mrb[0].mxu0
    %v2168 = vadd.f32 %v802, %v2167
    %v2169 = vpop.f32.mrb[0].mxu0
    %2170 = vmatprep.mubr.f32.mxu0 0.0
    %2171 = vmatmul.mubr.f32.gmra.mrb[0].mxu0 %v2062
    %v2172 = vpop.f32.mrb[0].mxu0
    %v2173 = vadd.f32 %v803, %v2172
    %v2174 = vpop.f32.mrb[0].mxu0
    %2175 = vmatprep.mubr.f32.mxu0 0.0
    %2176 = vmatmul.mubr.f32.gmra.mrb[0].mxu0 %v2064
    %v2177 = vpop.f32.mrb[0].mxu0
    %v2178 = vadd.f32 %v804, %v2177
    %v2179 = vpop.f32.mrb[0].mxu0
    %2180 = vmatprep.mubr.f32.mxu0 0.0
    %2181 = vmatmul.mubr.f32.gmra.mrb[0].mxu0 %v2066
    %v2182 = vpop.f32.mrb[0].mxu0
    %v2183 = vadd.f32 %v805, %v2182
    %v2184 = vpop.f32.mrb[0].mxu0
    %2185 = vmatprep.mubr.f32.mxu0 0.0
    %2186 = vmatmul.mubr.f32.gmra.mrb[0].mxu0 %v2068
    %v2187 = vpop.f32.mrb[0].mxu0
    %v2188 = vadd.f32 %v806, %v2187
    %v2189 = vpop.f32.mrb[0].mxu0
    %2190 = vdwg.mxu0
    %v2191 = vsel %vm49, %v2153, -inf
    %2192 = vmax.xlane.f32.xlu0 %v2191
    %v2193 = vpop.xlane.xlu0 %2192
    %v2194 = vsel %vm49, %v2158, -inf
    %2195 = vmax.xlane.f32.xlu0 %v2194
    %v2196 = vpop.xlane.xlu0 %2195
    %v2197 = vsel %vm49, %v2163, -inf
    %2198 = vmax.xlane.f32.xlu0 %v2197
    %v2199 = vpop.xlane.xlu0 %2198
    %v2200 = vsel %vm49, %v2168, -inf
    %2201 = vmax.xlane.f32.xlu0 %v2200
    %v2202 = vpop.xlane.xlu0 %2201
    %v2203 = vsel %vm49, %v2173, -inf
    %2204 = vmax.xlane.f32.xlu0 %v2203
    %v2205 = vpop.xlane.xlu0 %2204
    %v2206 = vsel %vm49, %v2178, -inf
    %2207 = vmax.xlane.f32.xlu0 %v2206
    %v2208 = vpop.xlane.xlu0 %2207
    %v2209 = vsel %vm49, %v2183, -inf
    %2210 = vmax.xlane.f32.xlu0 %v2209
    %v2211 = vpop.xlane.xlu0 %2210
    %v2212 = vsel %vm49, %v2188, -inf
    %2213 = vmax.xlane.f32.xlu0 %v2212
    %v2214 = vpop.xlane.xlu0 %2213
    %v2215 = vsub.f32 %v2153, %v2193
    %v2216 = vsub.f32 %v2158, %v2196
    %v2217 = vsub.f32 %v2163, %v2199
    %v2218 = vsub.f32 %v2168, %v2202
    %v2219 = vsub.f32 %v2173, %v2205
    %v2220 = vsub.f32 %v2178, %v2208
    %v2221 = vsub.f32 %v2183, %v2211
    %v2222 = vsub.f32 %v2188, %v2214
    %v2223 = vmul.f32 %v2215, 1.442695
    %v2224 = vpow.pop %v2223
    %v2225 = vmul.f32 %v2216, 1.442695
    %v2226 = vpow.pop %v2225
    %v2227 = vmul.f32 %v2217, 1.442695
    %v2228 = vpow.pop %v2227
    %v2229 = vmul.f32 %v2218, 1.442695
    %v2230 = vpow.pop %v2229
    %v2231 = vmul.f32 %v2219, 1.442695
    %v2232 = vpow.pop %v2231
    %v2233 = vmul.f32 %v2220, 1.442695
    %v2234 = vpow.pop %v2233
    %v2235 = vmul.f32 %v2221, 1.442695
    %v2236 = vpow.pop %v2235
    %v2237 = vmul.f32 %v2222, 1.442695
    %v2238 = vpow.pop %v2237
    %v2239 = vsel %vm49, %v2224, 0.0
    %2240 = vadd.xlane.f32.xlu0 %v2239
    %v2241 = vpop.xlane.xlu0 %2240
    %v2242 = vsel %vm49, %v2226, 0.0
    %2243 = vadd.xlane.f32.xlu0 %v2242
    %v2244 = vpop.xlane.xlu0 %2243
    %v2245 = vsel %vm49, %v2228, 0.0
    %2246 = vadd.xlane.f32.xlu0 %v2245
    %v2247 = vpop.xlane.xlu0 %2246
    %v2248 = vsel %vm49, %v2230, 0.0
    %2249 = vadd.xlane.f32.xlu0 %v2248
    %v2250 = vpop.xlane.xlu0 %2249
    %v2251 = vsel %vm49, %v2232, 0.0
    %2252 = vadd.xlane.f32.xlu0 %v2251
    %v2253 = vpop.xlane.xlu0 %2252
    %v2254 = vsel %vm49, %v2234, 0.0
    %2255 = vadd.xlane.f32.xlu0 %v2254
    %v2256 = vpop.xlane.xlu0 %2255
    %v2257 = vsel %vm49, %v2236, 0.0
    %2258 = vadd.xlane.f32.xlu0 %v2257
    %v2259 = vpop.xlane.xlu0 %2258
    %v2260 = vsel %vm49, %v2238, 0.0
    %2261 = vadd.xlane.f32.xlu0 %v2260
    %v2262 = vpop.xlane.xlu0 %2261
    %2271 = vrot.lane.b32.xlu0 %v662, 96
    %v2272 = vpop.permute.xlu0 %2271
    %2273 = vrot.lane.b32.xlu0 %v667, 96
    %v2274 = vpop.permute.xlu0 %2273
    %2275 = vrot.lane.b32.xlu0 %v672, 96
    %v2276 = vpop.permute.xlu0 %2275
    %2277 = vrot.lane.b32.xlu0 %v677, 96
    %v2278 = vpop.permute.xlu0 %2277
    %2279 = vrot.lane.b32.xlu0 %v682, 96
    %v2280 = vpop.permute.xlu0 %2279
    %2281 = vrot.lane.b32.xlu0 %v687, 96
    %v2282 = vpop.permute.xlu0 %2281
    %2283 = vrot.lane.b32.xlu0 %v692, 96
    %v2284 = vpop.permute.xlu0 %2283
    %2285 = vrot.lane.b32.xlu0 %v697, 96
    %v2286 = vpop.permute.xlu0 %2285
    %v2296 = vsel %vm49, %v2224, 0
    %v2299 = vsel %vm49, %v2226, 0
    %v2302 = vsel %vm49, %v2228, 0
    %v2305 = vsel %vm49, %v2230, 0
    %v2308 = vsel %vm49, %v2232, 0
    %v2311 = vsel %vm49, %v2234, 0
    %v2314 = vsel %vm49, %v2236, 0
    %v2317 = vsel %vm49, %v2238, 0
    %2319 = vmatprep.subr.mxu0 0.0
    %2320 = vmatpush1.msra.mxu0 %v2272
    %2321 = vmatprep.subr.mxu0 0.0
    %2322 = vmatpush1.msra.mxu0 %v2274
    %2323 = vmatprep.subr.mxu0 0.0
    %2324 = vmatpush1.msra.mxu0 %v2276
    %2325 = vmatprep.subr.mxu0 0.0
    %2326 = vmatpush1.msra.mxu0 %v2278
    %2327 = vmatprep.subr.mxu0 0.0
    %2328 = vmatpush1.msra.mxu0 %v2280
    %2329 = vmatprep.subr.mxu0 0.0
    %2330 = vmatpush1.msra.mxu0 %v2282
    %2331 = vmatprep.subr.mxu0 0.0
    %2332 = vmatpush1.msra.mxu0 %v2284
    %2333 = vmatprep.subr.mxu0 0.0
    %2334 = vmatpush1.msra.mxu0 %v2286
    %2335 = vmatprep.subr.mxu0 0.0
    %2336 = vmatpush1.msra.mxu0 0.0
    %2337 = vmatprep.subr.mxu0 0.0
    %2338 = vmatpush1.msra.mxu0 0.0
    %2339 = vmatprep.subr.mxu0 0.0
    %2340 = vmatpush1.msra.mxu0 0.0
    %2341 = vmatprep.subr.mxu0 0.0
    %2342 = vmatpush1.msra.mxu0 0.0
    %2343 = vmatprep.subr.mxu0 0.0
    %2344 = vmatpush1.msra.mxu0 0.0
    %2345 = vmatprep.subr.mxu0 0.0
    %2346 = vmatpush1.msra.mxu0 0.0
    %2347 = vmatprep.subr.mxu0 0.0
    %2348 = vmatpush1.msra.mxu0 0.0
    %2349 = vmatprep.subr.mxu0 0.0
    %2350 = vmatpush1.msra.mxu0 0.0
    %2351 = vmatprep.subr.mxu0 0.0
    %2352 = vmatpush1.msra.mxu0 0.0
    %2353 = vmatprep.subr.mxu0 0.0
    %2354 = vmatpush1.msra.mxu0 0.0
    %2355 = vmatprep.subr.mxu0 0.0
    %2356 = vmatpush1.msra.mxu0 0.0
    %2357 = vmatprep.subr.mxu0 0.0
    %2358 = vmatpush1.msra.mxu0 0.0
    %2359 = vmatprep.subr.mxu0 0.0
    %2360 = vmatpush1.msra.mxu0 0.0
    %2361 = vmatprep.subr.mxu0 0.0
    %2362 = vmatpush1.msra.mxu0 0.0
    %2363 = vmatprep.subr.mxu0 0.0
    %2364 = vmatpush1.msra.mxu0 0.0
    %2365 = vmatprep.subr.mxu0 0.0
    %2366 = vmatpush1.msra.mxu0 0.0
    %2367 = vmatprep.subr.mxu0 0.0
    %2368 = vmatpush1.msra.mxu0 0.0
    %2369 = vmatprep.subr.mxu0 0.0
    %2370 = vmatpush1.msra.mxu0 0.0
    %2371 = vmatprep.subr.mxu0 0.0
    %2372 = vmatpush1.msra.mxu0 0.0
    %2373 = vmatprep.subr.mxu0 0.0
    %2374 = vmatpush1.msra.mxu0 0.0
    %2375 = vmatprep.subr.mxu0 0.0
    %2376 = vmatpush1.msra.mxu0 0.0
    %2377 = vmatprep.subr.mxu0 0.0
    %2378 = vmatpush1.msra.mxu0 0.0
    %2379 = vmatprep.subr.mxu0 0.0
    %2380 = vmatpush1.msra.mxu0 0.0
    %2381 = vmatprep.subr.mxu0 0.0
    %2382 = vmatpush1.msra.mxu0 0.0
    %2383 = vmatprep.mubr.f32.mxu0 0.0
    %2384 = vmatmul.mubr.f32.gmra.mrb[0].mxu0 %v2296
    %v2385 = vpop.f32.mrb[0].mxu0
    %v2386 = vadd.f32 0.0, %v2385
    %v2387 = vpop.f32.mrb[0].mxu0
    %2388 = vmatprep.mubr.f32.mxu0 0.0
    %2389 = vmatmul.mubr.f32.gmra.mrb[0].mxu0 %v2299
    %v2390 = vpop.f32.mrb[0].mxu0
    %v2391 = vadd.f32 0.0, %v2390
    %v2392 = vpop.f32.mrb[0].mxu0
    %2393 = vmatprep.mubr.f32.mxu0 0.0
    %2394 = vmatmul.mubr.f32.gmra.mrb[0].mxu0 %v2302
    %v2395 = vpop.f32.mrb[0].mxu0
    %v2396 = vadd.f32 0.0, %v2395
    %v2397 = vpop.f32.mrb[0].mxu0
    %2398 = vmatprep.mubr.f32.mxu0 0.0
    %2399 = vmatmul.mubr.f32.gmra.mrb[0].mxu0 %v2305
    %v2400 = vpop.f32.mrb[0].mxu0
    %v2401 = vadd.f32 0.0, %v2400
    %v2402 = vpop.f32.mrb[0].mxu0
    %2403 = vmatprep.mubr.f32.mxu0 0.0
    %2404 = vmatmul.mubr.f32.gmra.mrb[0].mxu0 %v2308
    %v2405 = vpop.f32.mrb[0].mxu0
    %v2406 = vadd.f32 0.0, %v2405
    %v2407 = vpop.f32.mrb[0].mxu0
    %2408 = vmatprep.mubr.f32.mxu0 0.0
    %2409 = vmatmul.mubr.f32.gmra.mrb[0].mxu0 %v2311
    %v2410 = vpop.f32.mrb[0].mxu0
    %v2411 = vadd.f32 0.0, %v2410
    %v2412 = vpop.f32.mrb[0].mxu0
    %2413 = vmatprep.mubr.f32.mxu0 0.0
    %2414 = vmatmul.mubr.f32.gmra.mrb[0].mxu0 %v2314
    %v2415 = vpop.f32.mrb[0].mxu0
    %v2416 = vadd.f32 0.0, %v2415
    %v2417 = vpop.f32.mrb[0].mxu0
    %2418 = vmatprep.mubr.f32.mxu0 0.0
    %2419 = vmatmul.mubr.f32.gmra.mrb[0].mxu0 %v2317
    %v2420 = vpop.f32.mrb[0].mxu0
    %v2421 = vadd.f32 0.0, %v2420
    %v2422 = vpop.f32.mrb[0].mxu0
    %2423 = vdwg.mxu0
    %v2424 = vrcp.pop %v2241
    %v2425 = vrcp.pop %v2244
    %v2426 = vrcp.pop %v2247
    %v2427 = vrcp.pop %v2250
    %v2428 = vrcp.pop %v2253
    %v2429 = vrcp.pop %v2256
    %v2430 = vrcp.pop %v2259
    %v2431 = vrcp.pop %v2262
    %v2432 = vmul.f32 %v2386, %v2424
    %v2433 = vmul.f32 %v2391, %v2425
    %v2434 = vmul.f32 %v2396, %v2426
    %v2435 = vmul.f32 %v2401, %v2427
    %v2436 = vmul.f32 %v2406, %v2428
    %v2437 = vmul.f32 %v2411, %v2429
    %v2438 = vmul.f32 %v2416, %v2430
    %v2439 = vmul.f32 %v2421, %v2431
    %2448 = vrot.lane.b32.xlu0 %v2432, 32
    %v2449 = vpop.permute.xlu0 %2448
    %2450 = vrot.lane.b32.xlu0 %v2433, 32
    %v2451 = vpop.permute.xlu0 %2450
    %2452 = vrot.lane.b32.xlu0 %v2434, 32
    %v2453 = vpop.permute.xlu0 %2452
    %2454 = vrot.lane.b32.xlu0 %v2435, 32
    %v2455 = vpop.permute.xlu0 %2454
    %2456 = vrot.lane.b32.xlu0 %v2436, 32
    %v2457 = vpop.permute.xlu0 %2456
    %2458 = vrot.lane.b32.xlu0 %v2437, 32
    %v2459 = vpop.permute.xlu0 %2458
    %2460 = vrot.lane.b32.xlu0 %v2438, 32
    %v2461 = vpop.permute.xlu0 %2460
    %2462 = vrot.lane.b32.xlu0 %v2439, 32
    %v2463 = vpop.permute.xlu0 %2462
    %v2472 = vsel %vm831, %v2014, %v2449
    %v2473 = vsel %vm831, %v2015, %v2451
    %v2474 = vsel %vm831, %v2016, %v2453
    %v2475 = vsel %vm831, %v2017, %v2455
    %v2476 = vsel %vm831, %v2018, %v2457
    %v2477 = vsel %vm831, %v2019, %v2459
    %v2478 = vsel %vm831, %v2020, %v2461
    %v2479 = vsel %vm831, %v2021, %v2463
    %v2480 = vld [vmem:[%s7] sm:$0xff]
    %v2481 = vld [vmem:[%s7 + $0x8] sm:$0xff]
    %v2482 = vld [vmem:[%s7 + $0x10] sm:$0xff]
    %v2483 = vld [vmem:[%s7 + $0x18] sm:$0xff]
    %v2484 = vld [vmem:[%s7 + $0x20] sm:$0xff]
    %v2485 = vld [vmem:[%s7 + $0x28] sm:$0xff]
    %v2486 = vld [vmem:[%s7 + $0x30] sm:$0xff]
    %v2487 = vld [vmem:[%s7 + $0x38] sm:$0xff]
    %v2488 = vld [vmem:[%s8] sm:$0x1]
    %v2490 = vlaneseq
    %v2491 = vshrl.u32 %v2490, 7
    %v2492 = vsub.s32 0, %v2491
    %v2493 = vrot.slane %v2488, %v2492
    %v2496 = vsel %vm49, %v1636, 0
    %v2499 = vsel %vm49, %v1637, 0
    %v2502 = vsel %vm49, %v1638, 0
    %v2505 = vsel %vm49, %v1639, 0
    %v2508 = vsel %vm49, %v1640, 0
    %v2511 = vsel %vm49, %v1641, 0
    %v2514 = vsel %vm49, %v1642, 0
    %v2517 = vsel %vm49, %v1643, 0
    %v2520 = vsel %vm49, %v2472, 0
    %v2523 = vsel %vm49, %v2473, 0
    %v2526 = vsel %vm49, %v2474, 0
    %v2529 = vsel %vm49, %v2475, 0
    %v2532 = vsel %vm49, %v2476, 0
    %v2535 = vsel %vm49, %v2477, 0
    %v2538 = vsel %vm49, %v2478, 0
    %v2541 = vsel %vm49, %v2479, 0
    %2543 = vmatprep.subr.mxu0 0.0
    %2544 = vmatpush1.msra.mxu0 %v2480
    %2545 = vmatprep.subr.mxu0 0.0
    %2546 = vmatpush1.msra.mxu0 %v2481
    %2547 = vmatprep.subr.mxu0 0.0
    %2548 = vmatpush1.msra.mxu0 %v2482
    %2549 = vmatprep.subr.mxu0 0.0
    %2550 = vmatpush1.msra.mxu0 %v2483
    %2551 = vmatprep.subr.mxu0 0.0
    %2552 = vmatpush1.msra.mxu0 %v2484
    %2553 = vmatprep.subr.mxu0 0.0
    %2554 = vmatpush1.msra.mxu0 %v2485
    %2555 = vmatprep.subr.mxu0 0.0
    %2556 = vmatpush1.msra.mxu0 %v2486
    %2557 = vmatprep.subr.mxu0 0.0
    %2558 = vmatpush1.msra.mxu0 %v2487
    %2559 = vmatprep.subr.mxu0 0.0
    %2560 = vmatpush1.msra.mxu0 0.0
    %2561 = vmatprep.subr.mxu0 0.0
    %2562 = vmatpush1.msra.mxu0 0.0
    %2563 = vmatprep.subr.mxu0 0.0
    %2564 = vmatpush1.msra.mxu0 0.0
    %2565 = vmatprep.subr.mxu0 0.0
    %2566 = vmatpush1.msra.mxu0 0.0
    %2567 = vmatprep.subr.mxu0 0.0
    %2568 = vmatpush1.msra.mxu0 0.0
    %2569 = vmatprep.subr.mxu0 0.0
    %2570 = vmatpush1.msra.mxu0 0.0
    %2571 = vmatprep.subr.mxu0 0.0
    %2572 = vmatpush1.msra.mxu0 0.0
    %2573 = vmatprep.subr.mxu0 0.0
    %2574 = vmatpush1.msra.mxu0 0.0
    %2575 = vmatprep.subr.mxu0 0.0
    %2576 = vmatpush1.msra.mxu0 0.0
    %2577 = vmatprep.subr.mxu0 0.0
    %2578 = vmatpush1.msra.mxu0 0.0
    %2579 = vmatprep.subr.mxu0 0.0
    %2580 = vmatpush1.msra.mxu0 0.0
    %2581 = vmatprep.subr.mxu0 0.0
    %2582 = vmatpush1.msra.mxu0 0.0
    %2583 = vmatprep.subr.mxu0 0.0
    %2584 = vmatpush1.msra.mxu0 0.0
    %2585 = vmatprep.subr.mxu0 0.0
    %2586 = vmatpush1.msra.mxu0 0.0
    %2587 = vmatprep.subr.mxu0 0.0
    %2588 = vmatpush1.msra.mxu0 0.0
    %2589 = vmatprep.subr.mxu0 0.0
    %2590 = vmatpush1.msra.mxu0 0.0
    %2591 = vmatprep.subr.mxu0 0.0
    %2592 = vmatpush1.msra.mxu0 0.0
    %2593 = vmatprep.subr.mxu0 0.0
    %2594 = vmatpush1.msra.mxu0 0.0
    %2595 = vmatprep.subr.mxu0 0.0
    %2596 = vmatpush1.msra.mxu0 0.0
    %2597 = vmatprep.subr.mxu0 0.0
    %2598 = vmatpush1.msra.mxu0 0.0
    %2599 = vmatprep.subr.mxu0 0.0
    %2600 = vmatpush1.msra.mxu0 0.0
    %2601 = vmatprep.subr.mxu0 0.0
    %2602 = vmatpush1.msra.mxu0 0.0
    %2603 = vmatprep.subr.mxu0 0.0
    %2604 = vmatpush1.msra.mxu0 0.0
    %2605 = vmatprep.subr.mxu0 0.0
    %2606 = vmatpush1.msra.mxu0 0.0
    %2607 = vmatprep.mubr.f32.mxu0 0.0
    %2608 = vmatmul.mubr.f32.gmra.mrb[0].mxu0 %v2496
    %v2609 = vpop.f32.mrb[0].mxu0
    %v2610 = vadd.f32 %v2493, %v2609
    %v2611 = vpop.f32.mrb[0].mxu0
    %2612 = vmatprep.mubr.f32.mxu0 0.0
    %2613 = vmatmul.mubr.f32.gmra.mrb[0].mxu0 %v2499
    %v2614 = vpop.f32.mrb[0].mxu0
    %v2615 = vadd.f32 %v2493, %v2614
    %v2616 = vpop.f32.mrb[0].mxu0
    %2617 = vmatprep.mubr.f32.mxu0 0.0
    %2618 = vmatmul.mubr.f32.gmra.mrb[0].mxu0 %v2502
    %v2619 = vpop.f32.mrb[0].mxu0
    %v2620 = vadd.f32 %v2493, %v2619
    %v2621 = vpop.f32.mrb[0].mxu0
    %2622 = vmatprep.mubr.f32.mxu0 0.0
    %2623 = vmatmul.mubr.f32.gmra.mrb[0].mxu0 %v2505
    %v2624 = vpop.f32.mrb[0].mxu0
    %v2625 = vadd.f32 %v2493, %v2624
    %v2626 = vpop.f32.mrb[0].mxu0
    %2627 = vmatprep.mubr.f32.mxu0 0.0
    %2628 = vmatmul.mubr.f32.gmra.mrb[0].mxu0 %v2508
    %v2629 = vpop.f32.mrb[0].mxu0
    %v2630 = vadd.f32 %v2493, %v2629
    %v2631 = vpop.f32.mrb[0].mxu0
    %2632 = vmatprep.mubr.f32.mxu0 0.0
    %2633 = vmatmul.mubr.f32.gmra.mrb[0].mxu0 %v2511
    %v2634 = vpop.f32.mrb[0].mxu0
    %v2635 = vadd.f32 %v2493, %v2634
    %v2636 = vpop.f32.mrb[0].mxu0
    %2637 = vmatprep.mubr.f32.mxu0 0.0
    %2638 = vmatmul.mubr.f32.gmra.mrb[0].mxu0 %v2514
    %v2639 = vpop.f32.mrb[0].mxu0
    %v2640 = vadd.f32 %v2493, %v2639
    %v2641 = vpop.f32.mrb[0].mxu0
    %2642 = vmatprep.mubr.f32.mxu0 0.0
    %2643 = vmatmul.mubr.f32.gmra.mrb[0].mxu0 %v2517
    %v2644 = vpop.f32.mrb[0].mxu0
    %v2645 = vadd.f32 %v2493, %v2644
    %v2646 = vpop.f32.mrb[0].mxu0
    %2647 = vmatprep.mubr.f32.mxu0 0.0
    %2648 = vmatmul.mubr.f32.gmra.mrb[0].mxu0 %v2520
    %v2649 = vpop.f32.mrb[0].mxu0
    %v2650 = vadd.f32 %v2493, %v2649
    %v2651 = vpop.f32.mrb[0].mxu0
    %2652 = vmatprep.mubr.f32.mxu0 0.0
    %2653 = vmatmul.mubr.f32.gmra.mrb[0].mxu0 %v2523
    %v2654 = vpop.f32.mrb[0].mxu0
    %v2655 = vadd.f32 %v2493, %v2654
    %v2656 = vpop.f32.mrb[0].mxu0
    %2657 = vmatprep.mubr.f32.mxu0 0.0
    %2658 = vmatmul.mubr.f32.gmra.mrb[0].mxu0 %v2526
    %v2659 = vpop.f32.mrb[0].mxu0
    %v2660 = vadd.f32 %v2493, %v2659
    %v2661 = vpop.f32.mrb[0].mxu0
    %2662 = vmatprep.mubr.f32.mxu0 0.0
    %2663 = vmatmul.mubr.f32.gmra.mrb[0].mxu0 %v2529
    %v2664 = vpop.f32.mrb[0].mxu0
    %v2665 = vadd.f32 %v2493, %v2664
    %v2666 = vpop.f32.mrb[0].mxu0
    %2667 = vmatprep.mubr.f32.mxu0 0.0
    %2668 = vmatmul.mubr.f32.gmra.mrb[0].mxu0 %v2532
    %v2669 = vpop.f32.mrb[0].mxu0
    %v2670 = vadd.f32 %v2493, %v2669
    %v2671 = vpop.f32.mrb[0].mxu0
    %2672 = vmatprep.mubr.f32.mxu0 0.0
    %2673 = vmatmul.mubr.f32.gmra.mrb[0].mxu0 %v2535
    %v2674 = vpop.f32.mrb[0].mxu0
    %v2675 = vadd.f32 %v2493, %v2674
    %v2676 = vpop.f32.mrb[0].mxu0
    %2677 = vmatprep.mubr.f32.mxu0 0.0
    %2678 = vmatmul.mubr.f32.gmra.mrb[0].mxu0 %v2538
    %v2679 = vpop.f32.mrb[0].mxu0
    %v2680 = vadd.f32 %v2493, %v2679
    %v2681 = vpop.f32.mrb[0].mxu0
    %2682 = vmatprep.mubr.f32.mxu0 0.0
    %2683 = vmatmul.mubr.f32.gmra.mrb[0].mxu0 %v2541
    %v2684 = vpop.f32.mrb[0].mxu0
    %v2685 = vadd.f32 %v2493, %v2684
    %v2686 = vpop.f32.mrb[0].mxu0
    %2687 = vdwg.mxu0
    %2688 = vst.msk [vmem:[#allocation2] sm:$0xff] %vm49, %v2610
    %2689 = vst.msk [vmem:[#allocation2 + $0x8] sm:$0xff] %vm49, %v2615
    %2690 = vst.msk [vmem:[#allocation2 + $0x10] sm:$0xff] %vm49, %v2620
    %2691 = vst.msk [vmem:[#allocation2 + $0x18] sm:$0xff] %vm49, %v2625
    %2692 = vst.msk [vmem:[#allocation2 + $0x20] sm:$0xff] %vm49, %v2630
    %2693 = vst.msk [vmem:[#allocation2 + $0x28] sm:$0xff] %vm49, %v2635
    %2694 = vst.msk [vmem:[#allocation2 + $0x30] sm:$0xff] %vm49, %v2640
    %2695 = vst.msk [vmem:[#allocation2 + $0x38] sm:$0xff] %vm49, %v2645
    %2696 = vst.msk [vmem:[#allocation2 + $0x40] sm:$0xff] %vm49, %v2650
    %2697 = vst.msk [vmem:[#allocation2 + $0x48] sm:$0xff] %vm49, %v2655
    %2698 = vst.msk [vmem:[#allocation2 + $0x50] sm:$0xff] %vm49, %v2660
    %2699 = vst.msk [vmem:[#allocation2 + $0x58] sm:$0xff] %vm49, %v2665
    %2700 = vst.msk [vmem:[#allocation2 + $0x60] sm:$0xff] %vm49, %v2670
    %2701 = vst.msk [vmem:[#allocation2 + $0x68] sm:$0xff] %vm49, %v2675
    %2702 = vst.msk [vmem:[#allocation2 + $0x70] sm:$0xff] %vm49, %v2680
    %2703 = vst.msk [vmem:[#allocation2 + $0x78] sm:$0xff] %vm49, %v2685
    // Predicated region
    $region38: #{self_attention_forward.1} parent=1 // pred_check
      _
    $region39: #{self_attention_forward.1} parent=1 // pred_check_branch
      %2705 = sbr.rel (0) target = $region41
    $region40: #{self_attention_forward.1} parent=1 // pred_region
      %s2707 = ssub.s32 2048, 2048
      %2708 = vsyncadd [#allocation3], %s2707
      %s2709 = sshll.u32 [#allocation2], 4
      %s2710 = int_to_ptr.vmem [resolvable:$true] %s2709
      %2715 = dma.vmem_to_hbm [thread:$0]  %s2710, 2048, %s9, [#allocation3], 128, 128, 8
    $region41: #{self_attention_forward.1} parent=1 // pred_fallthru
      _
    // Predicated region
    $region42: #{self_attention_forward.1} parent=1 // pred_check
      _
    $region43: #{self_attention_forward.1} parent=1 // pred_check_branch
      %2717 = sbr.rel (0) target = $region45
    $region44: #{self_attention_forward.1} parent=1 // pred_region
      %2718 = dma.done [#allocation3], 2048
    $region45: #{self_attention_forward.1} parent=1 // pred_fallthru
      _
    %2719 = vsyncpa [#allocation3], 1

</llo_original>
